<compile_context>
chip_gen: v6e
topology: v6e:2x2x1
jax: 0.10.0
libtpu: 0.0.40
codegen_flags: <defaults>
</compile_context>

<pallas_src>
import jax
import jax.numpy as jnp
from jax.experimental import pallas as pl
from jax.experimental.pallas import tpu as pltpu

VMEM = pl.BlockSpec(memory_space=pltpu.MemorySpace.VMEM)


# ----------------------------------------------------------------------------
# Fused forward + loss kernel
# ----------------------------------------------------------------------------
def _fused_forward_loss_kernel(
    # inputs
    con_ref, sti_ref, sty_ref,
    c1w_ref, c1b_ref, c2w_ref, c2b_ref,
    s1w_ref, s1b_ref, s2w_ref, s2b_ref,
    d1wc_ref, d1ws_ref, d1b_ref, d2w_ref, d2b_ref,
    # outputs
    st_c1_o, st_c2_o, sc_c1_o, sc_c2_o,
    st_s1_o, st_s2_o, fk_s1_o, fk_s2_o,
    st_real_o, st_fake_o, loss_o,
):
    f32 = jnp.float32
    bf16 = jnp.bfloat16
    CONTRACT = (((1,), (0,)), ((), ()))    # [M,K] @ [K,N]
    GRAM_DIMS = (((1,), (1,)), ((), ()))   # [N,D] x [N,D] -> [N,N] (no transpose)

    N = con_ref.shape[0]

    def mm(x_b, w_b):
        # bf16 operands (MXU-native on all generations); f32 accumulation.
        return jax.lax.dot_general(x_b, w_b, CONTRACT,
                                   preferred_element_type=f32)

    def lin(x_b, w_ref, b_ref):            # relu(x @ W + b), f32 result
        return jnp.maximum(mm(x_b, w_ref[...]) + b_ref[...], 0.0)

    # ---- loss helpers (all f32 VPU/EUP work) --------------------------------
    def sum_all(x):                         # (1,1) lane-then-sublane reduction
        return jnp.sum(jnp.sum(x, axis=1, keepdims=True), axis=0, keepdims=True)

    def mse_mean(a, b):
        d = a - b
        return sum_all(d * d) / f32(d.shape[0] * d.shape[1])

    def gram(x_b):                          # bf16 operands, f32 accumulation
        b, d = x_b.shape
        g = jax.lax.dot_general(x_b, x_b, GRAM_DIMS, preferred_element_type=f32)
        return g / f32(b * d)

    def gram_mse_sum(fake_b, target_b):     # grams never touch HBM
        d = gram(fake_b) - gram(target_b)
        return sum_all(d * d)

    def cos_mean(a, b):
        # torch cosine_similarity: dot / (max(||a||, eps) * max(||b||, eps))
        eps2 = f32(1e-16)                   # (eps=1e-8) ** 2
        ab = jnp.sum(a * b, axis=1, keepdims=True)
        na2 = jnp.sum(a * a, axis=1, keepdims=True)
        nb2 = jnp.sum(b * b, axis=1, keepdims=True)
        cos = (ab
               * jax.lax.rsqrt(jnp.maximum(na2, eps2))      # EUP slot
               * jax.lax.rsqrt(jnp.maximum(nb2, eps2)))
        return jnp.mean(cos, axis=0, keepdims=True)

    # ---- inputs: cast to bf16 exactly once; keep f32 sti for cosine loss ----
    sti_f32 = sti_ref[...]
    sti_b = sti_f32.astype(bf16)
    con_b = con_ref[...].astype(bf16)
    sty_b = sty_ref[...].astype(bf16)

    # ================= content encoder (stacked: rows [0:N]=st, [N:2N]=sc) ===
    xc = jnp.concatenate([sti_b, con_b], axis=0)           # (2N, genes) bf16
    c1 = lin(xc, c1w_ref, c1b_ref)                          # (2N, h1) f32
    st_c1, sc_c1 = c1[:N], c1[N:]
    st_c1_o[...] = st_c1
    sc_c1_o[...] = sc_c1
    cont_loss = mse_mean(st_c1, sc_c1)                      # interleaved loss

    c1_b = c1.astype(bf16)
    c2 = lin(c1_b, c2w_ref, c2b_ref)                        # (2N, h2) f32
    st_c2, sc_c2 = c2[:N], c2[N:]
    st_c2_o[...] = st_c2
    sc_c2_o[...] = sc_c2
    cont_loss = cont_loss + mse_mean(st_c2, sc_c2)

    # ================= style encoder (stacked: rows [0:N]=st, [N:2N]=fake) ===
    xs = jnp.concatenate([sti_b, sty_b], axis=0)            # (2N, genes) bf16
    s1 = lin(xs, s1w_ref, s1b_ref)                          # (2N, h1) f32
    st_s1_o[...] = s1[:N]
    fk_s1_o[...] = s1[N:]
    s1_b = s1.astype(bf16)                                   # shared cast
    style_loss = gram_mse_sum(s1_b[N:], s1_b[:N])           # interleaved loss

    s2 = lin(s1_b, s2w_ref, s2b_ref)                        # (2N, h2) f32
    st_s2_o[...] = s2[:N]
    fk_s2_o[...] = s2[N:]
    s2_b = s2.astype(bf16)                                   # shared cast
    style_loss = style_loss + gram_mse_sum(s2_b[N:], s2_b[:N])

    # ================= decoder (stacked: content || style, split weights) ====
    c2_b = c2.astype(bf16)
    h = jnp.maximum(
        mm(c2_b, d1wc_ref[...]) + mm(s2_b, d1ws_ref[...]) + d1b_ref[...], 0.0)
    dec = mm(h.astype(bf16), d2w_ref[...]) + d2b_ref[...]   # (2N, genes) f32
    st_real, st_fake = dec[:N], dec[N:]
    st_real_o[...] = st_real
    st_fake_o[...] = st_fake

    # ================= cosine losses (f32, uses f32 sti) =====================
    cs_loss = ((1.0 - cos_mean(st_real, st_fake))
               + (1.0 - cos_mean(st_real, sti_f32)))
    total_loss = cs_loss          # reference: self.loss = cs_loss (only)

    # pack all scalars into one lane-dense row: [total, cont, style, cs, 0...]
    lane = jax.lax.broadcasted_iota(jnp.int32, (1, 128), 1)
    loss_o[...] = (jnp.where(lane == 0, total_loss, 0.0)
                   + jnp.where(lane == 1, cont_loss, 0.0)
                   + jnp.where(lane == 2, style_loss, 0.0)
                   + jnp.where(lane == 3, cs_loss, 0.0))


# ----------------------------------------------------------------------------
# Wrapper: one pallas_call for forward + losses
# ----------------------------------------------------------------------------
def _gimvi_step_impl(params, con, sti, sty):
    n, genes = con.shape
    h1 = params["c1"][0].shape[1]
    h2 = params["c2"][0].shape[1]
    f32 = jnp.float32

    out_shape = (
        jax.ShapeDtypeStruct((n, h1), f32),    # st_cont1
        jax.ShapeDtypeStruct((n, h2), f32),    # st_cont2
        jax.ShapeDtypeStruct((n, h1), f32),    # sc_cont1
        jax.ShapeDtypeStruct((n, h2), f32),    # sc_cont2
        jax.ShapeDtypeStruct((n, h1), f32),    # st_style1
        jax.ShapeDtypeStruct((n, h2), f32),    # st_style2
        jax.ShapeDtypeStruct((n, h1), f32),    # fake_style1
        jax.ShapeDtypeStruct((n, h2), f32),    # fake_style2
        jax.ShapeDtypeStruct((n, genes), f32), # st_real
        jax.ShapeDtypeStruct((n, genes), f32), # st_fake
        jax.ShapeDtypeStruct((1, 128), f32),   # packed losses (lane-dense)
    )

    args = (
        con, sti, sty,
        params["c1"][0], params["c1"][1],
        params["c2"][0], params["c2"][1],
        params["s1"][0], params["s1"][1],
        params["s2"][0], params["s2"][1],
        params["d1_c"], params["d1_s"], params["d1_b"],
        params["d2"][0], params["d2"][1],
    )

    res = pl.pallas_call(
        _fused_forward_loss_kernel,
        out_shape=out_shape,
        in_specs=[VMEM] * len(args),
        out_specs=tuple([VMEM] * len(out_shape)),
        compiler_params=pltpu.CompilerParams(
            vmem_limit_bytes=32 * 1024 * 1024),   # portable to v7x (64 MiB VMEM)
    )(*args)

    (st_c1, st_c2, sc_c1, sc_c2, st_s1, st_s2, fk_s1, fk_s2,
     st_real, st_fake, loss_vec) = res

    out = {
        "st_cont1": st_c1, "st_cont2": st_c2,
        "sc_cont1": sc_c1, "sc_cont2": sc_c2,
        "st_style1": st_s1, "st_style2": st_s2,
        "fake_style1": fk_s1, "fake_style2": fk_s2,
        "st_real": st_real, "st_fake": st_fake,
    }
    losses = {
        "total_loss": loss_vec[0, 0],
        "cont_loss": loss_vec[0, 1],
        "style_loss": loss_vec[0, 2],
        "cs_loss": loss_vec[0, 3],
    }
    return out, losses


gimvi_step = jax.jit(_gimvi_step_impl)


# ----------------------------------------------------------------------------
# Parameter init (deterministic, torch.nn.Linear-style uniform)
# Weights are stored bf16 (MXU operands); biases stay f32 (VPU adds).
# ----------------------------------------------------------------------------
def _init_linear(key, din, dout, w_dtype=jnp.bfloat16):
    kw, kb = jax.random.split(key)
    bound = 1.0 / (din ** 0.5)
    w = jax.random.uniform(kw, (din, dout), jnp.float32, -bound, bound)
    b = jax.random.uniform(kb, (1, dout), jnp.float32, -bound, bound)
    return w.astype(w_dtype), b


def init_params(key, genes, h1, h2):
    keys = jax.random.split(key, 6)
    params = {}
    params["c1"] = _init_linear(keys[0], genes, h1)   # content encoder
    params["c2"] = _init_linear(keys[1], h1, h2)
    params["s1"] = _init_linear(keys[2], genes, h1)   # style encoder
    params["s2"] = _init_linear(keys[3], h1, h2)
    # decoder layer 1: (content || style) -> h1, pre-split to avoid the concat
    d1w, d1b = _init_linear(keys[4], 2 * h2, h1, w_dtype=jnp.float32)
    params["d1_c"] = d1w[:h2, :].astype(jnp.bfloat16)
    params["d1_s"] = d1w[h2:, :].astype(jnp.bfloat16)
    params["d1_b"] = d1b
    params["d2"] = _init_linear(keys[5], h1, genes)
    return params


# ----------------------------------------------------------------------------
if __name__ == "__main__":
    # small but lane-/MXU-friendly shapes: feature dims are multiples of 128
    N, GENES, H1, H2 = 16, 128, 128, 128

    key = jax.random.PRNGKey(0)
    k_par, k_con, k_sti, k_sty = jax.random.split(key, 4)

    params = init_params(k_par, GENES, H1, H2)
    con = jax.random.normal(k_con, (N, GENES), jnp.float32)
    sti = jax.random.normal(k_sti, (N, GENES), jnp.float32)
    sty = jax.random.normal(k_sty, (N, GENES), jnp.float32)

    out, losses = gimvi_step(params, con, sti, sty)
    jax.block_until_ready(out)
    jax.block_until_ready(losses)

    # light sanity checks
    assert out["st_fake"].shape == (N, GENES)
    assert out["st_real"].shape == (N, GENES)
    assert out["st_cont2"].shape == (N, H2)
    assert all(bool(jnp.isfinite(v)) for v in losses.values())
    assert bool(jnp.allclose(losses["total_loss"], losses["cs_loss"]))

    print("KERNEL_OK")
</pallas_src>

<mosaic_0001>
module attributes {stable_mosaic.version = 11 : i64} {
  func.func @_fused_forward_loss_kernel(%arg0: memref<16x128xf32, #tpu.memory_space<vmem>>, %arg1: memref<16x128xf32, #tpu.memory_space<vmem>>, %arg2: memref<16x128xf32, #tpu.memory_space<vmem>>, %arg3: memref<128x128xbf16, #tpu.memory_space<vmem>>, %arg4: memref<1x128xf32, #tpu.memory_space<vmem>>, %arg5: memref<128x128xbf16, #tpu.memory_space<vmem>>, %arg6: memref<1x128xf32, #tpu.memory_space<vmem>>, %arg7: memref<128x128xbf16, #tpu.memory_space<vmem>>, %arg8: memref<1x128xf32, #tpu.memory_space<vmem>>, %arg9: memref<128x128xbf16, #tpu.memory_space<vmem>>, %arg10: memref<1x128xf32, #tpu.memory_space<vmem>>, %arg11: memref<128x128xbf16, #tpu.memory_space<vmem>>, %arg12: memref<128x128xbf16, #tpu.memory_space<vmem>>, %arg13: memref<1x128xf32, #tpu.memory_space<vmem>>, %arg14: memref<128x128xbf16, #tpu.memory_space<vmem>>, %arg15: memref<1x128xf32, #tpu.memory_space<vmem>>, %arg16: memref<16x128xf32, #tpu.memory_space<vmem>>, %arg17: memref<16x128xf32, #tpu.memory_space<vmem>>, %arg18: memref<16x128xf32, #tpu.memory_space<vmem>>, %arg19: memref<16x128xf32, #tpu.memory_space<vmem>>, %arg20: memref<16x128xf32, #tpu.memory_space<vmem>>, %arg21: memref<16x128xf32, #tpu.memory_space<vmem>>, %arg22: memref<16x128xf32, #tpu.memory_space<vmem>>, %arg23: memref<16x128xf32, #tpu.memory_space<vmem>>, %arg24: memref<16x128xf32, #tpu.memory_space<vmem>>, %arg25: memref<16x128xf32, #tpu.memory_space<vmem>>, %arg26: memref<1x128xf32, #tpu.memory_space<vmem>>) attributes {dimension_semantics = [], scalar_prefetch = 0 : i64, scratch_operands = 0 : i64, tpu.core_type = #tpu.core_type<tc>} {
    %c0 = arith.constant 0 : index
    %c0_0 = arith.constant 0 : index
    %0 = vector.load %arg1[%c0, %c0_0] : memref<16x128xf32, #tpu.memory_space<vmem>>, vector<16x128xf32>
    %1 = arith.truncf %0 : vector<16x128xf32> to vector<16x128xbf16>
    %c0_1 = arith.constant 0 : index
    %c0_2 = arith.constant 0 : index
    %2 = vector.load %arg0[%c0_1, %c0_2] : memref<16x128xf32, #tpu.memory_space<vmem>>, vector<16x128xf32>
    %3 = arith.truncf %2 : vector<16x128xf32> to vector<16x128xbf16>
    %c0_3 = arith.constant 0 : index
    %c0_4 = arith.constant 0 : index
    %4 = vector.load %arg2[%c0_3, %c0_4] : memref<16x128xf32, #tpu.memory_space<vmem>>, vector<16x128xf32>
    %5 = arith.truncf %4 : vector<16x128xf32> to vector<16x128xbf16>
    %6 = tpu.concatenate %1, %3 in 0 : vector<16x128xbf16>, vector<16x128xbf16> -> vector<32x128xbf16>
    %c0_5 = arith.constant 0 : index
    %c0_6 = arith.constant 0 : index
    %7 = vector.load %arg3[%c0_5, %c0_6] : memref<128x128xbf16, #tpu.memory_space<vmem>>, vector<128x128xbf16>
    %cst = arith.constant dense<0.000000e+00> : vector<32x128xf32>
    %8 = tpu.matmul %6, %7, %cst {dimension_numbers = #tpu.dot_dimension_numbers<[1], [0], [0], [1], [0, 0, 1, 1], [], []>} : vector<32x128xbf16>, vector<128x128xbf16>, vector<32x128xf32> -> vector<32x128xf32>
    %c0_7 = arith.constant 0 : index
    %c0_8 = arith.constant 0 : index
    %9 = vector.load %arg4[%c0_7, %c0_8] : memref<1x128xf32, #tpu.memory_space<vmem>>, vector<1x128xf32>
    %10 = vector.broadcast %9 : vector<1x128xf32> to vector<32x128xf32>
    %11 = arith.addf %8, %10 : vector<32x128xf32>
    %cst_9 = arith.constant 0.000000e+00 : f32
    %12 = vector.broadcast %cst_9 : f32 to vector<32x128xf32>
    %13 = arith.maximumf %11, %12 : vector<32x128xf32>
    %14 = vector.extract_strided_slice %13 {offsets = [0, 0], sizes = [16, 128], strides = [1, 1]} : vector<32x128xf32> to vector<16x128xf32>
    %15 = vector.extract_strided_slice %13 {offsets = [16, 0], sizes = [16, 128], strides = [1, 1]} : vector<32x128xf32> to vector<16x128xf32>
    %c0_10 = arith.constant 0 : index
    %c0_11 = arith.constant 0 : index
    %16 = vector.load %arg16[%c0_10, %c0_11] : memref<16x128xf32, #tpu.memory_space<vmem>>, vector<16x128xf32>
    tpu.vector_store %arg16[%c0_10, %c0_11], %14 {strides = array<i32>} : memref<16x128xf32, #tpu.memory_space<vmem>>, vector<16x128xf32>,
    %c0_12 = arith.constant 0 : index
    %c0_13 = arith.constant 0 : index
    %17 = vector.load %arg18[%c0_12, %c0_13] : memref<16x128xf32, #tpu.memory_space<vmem>>, vector<16x128xf32>
    tpu.vector_store %arg18[%c0_12, %c0_13], %15 {strides = array<i32>} : memref<16x128xf32, #tpu.memory_space<vmem>>, vector<16x128xf32>,
    %18 = arith.subf %14, %15 : vector<16x128xf32>
    %19 = arith.mulf %18, %18 : vector<16x128xf32>
    %cst_14 = arith.constant dense<0.000000e+00> : vector<16xf32>
    %20 = vector.multi_reduction <add>, %19, %cst_14 [1] : vector<16x128xf32> to vector<16xf32>
    %21 = vector.shape_cast %20 : vector<16xf32> to vector<16x1xf32>
    %cst_15 = arith.constant dense<0.000000e+00> : vector<1xf32>
    %22 = vector.multi_reduction <add>, %21, %cst_15 [0] : vector<16x1xf32> to vector<1xf32>
    %23 = vector.shape_cast %22 : vector<1xf32> to vector<1x1xf32>
    %cst_16 = arith.constant 2.048000e+03 : f32
    %24 = vector.broadcast %cst_16 : f32 to vector<1x1xf32>
    %25 = arith.divf %23, %24 : vector<1x1xf32>
    %26 = arith.truncf %13 : vector<32x128xf32> to vector<32x128xbf16>
    %c0_17 = arith.constant 0 : index
    %c0_18 = arith.constant 0 : index
    %27 = vector.load %arg5[%c0_17, %c0_18] : memref<128x128xbf16, #tpu.memory_space<vmem>>, vector<128x128xbf16>
    %cst_19 = arith.constant dense<0.000000e+00> : vector<32x128xf32>
    %28 = tpu.matmul %26, %27, %cst_19 {dimension_numbers = #tpu.dot_dimension_numbers<[1], [0], [0], [1], [0, 0, 1, 1], [], []>} : vector<32x128xbf16>, vector<128x128xbf16>, vector<32x128xf32> -> vector<32x128xf32>
    %c0_20 = arith.constant 0 : index
    %c0_21 = arith.constant 0 : index
    %29 = vector.load %arg6[%c0_20, %c0_21] : memref<1x128xf32, #tpu.memory_space<vmem>>, vector<1x128xf32>
    %30 = vector.broadcast %29 : vector<1x128xf32> to vector<32x128xf32>
    %31 = arith.addf %28, %30 : vector<32x128xf32>
    %cst_22 = arith.constant 0.000000e+00 : f32
    %32 = vector.broadcast %cst_22 : f32 to vector<32x128xf32>
    %33 = arith.maximumf %31, %32 : vector<32x128xf32>
    %34 = vector.extract_strided_slice %33 {offsets = [0, 0], sizes = [16, 128], strides = [1, 1]} : vector<32x128xf32> to vector<16x128xf32>
    %35 = vector.extract_strided_slice %33 {offsets = [16, 0], sizes = [16, 128], strides = [1, 1]} : vector<32x128xf32> to vector<16x128xf32>
    %c0_23 = arith.constant 0 : index
    %c0_24 = arith.constant 0 : index
    %36 = vector.load %arg17[%c0_23, %c0_24] : memref<16x128xf32, #tpu.memory_space<vmem>>, vector<16x128xf32>
    tpu.vector_store %arg17[%c0_23, %c0_24], %34 {strides = array<i32>} : memref<16x128xf32, #tpu.memory_space<vmem>>, vector<16x128xf32>,
    %c0_25 = arith.constant 0 : index
    %c0_26 = arith.constant 0 : index
    %37 = vector.load %arg19[%c0_25, %c0_26] : memref<16x128xf32, #tpu.memory_space<vmem>>, vector<16x128xf32>
    tpu.vector_store %arg19[%c0_25, %c0_26], %35 {strides = array<i32>} : memref<16x128xf32, #tpu.memory_space<vmem>>, vector<16x128xf32>,
    %38 = arith.subf %34, %35 : vector<16x128xf32>
    %39 = arith.mulf %38, %38 : vector<16x128xf32>
    %cst_27 = arith.constant dense<0.000000e+00> : vector<16xf32>
    %40 = vector.multi_reduction <add>, %39, %cst_27 [1] : vector<16x128xf32> to vector<16xf32>
    %41 = vector.shape_cast %40 : vector<16xf32> to vector<16x1xf32>
    %cst_28 = arith.constant dense<0.000000e+00> : vector<1xf32>
    %42 = vector.multi_reduction <add>, %41, %cst_28 [0] : vector<16x1xf32> to vector<1xf32>
    %43 = vector.shape_cast %42 : vector<1xf32> to vector<1x1xf32>
    %cst_29 = arith.constant 2.048000e+03 : f32
    %44 = vector.broadcast %cst_29 : f32 to vector<1x1xf32>
    %45 = arith.divf %43, %44 : vector<1x1xf32>
    %46 = arith.addf %25, %45 : vector<1x1xf32>
    %47 = tpu.concatenate %1, %5 in 0 : vector<16x128xbf16>, vector<16x128xbf16> -> vector<32x128xbf16>
    %c0_30 = arith.constant 0 : index
    %c0_31 = arith.constant 0 : index
    %48 = vector.load %arg7[%c0_30, %c0_31] : memref<128x128xbf16, #tpu.memory_space<vmem>>, vector<128x128xbf16>
    %cst_32 = arith.constant dense<0.000000e+00> : vector<32x128xf32>
    %49 = tpu.matmul %47, %48, %cst_32 {dimension_numbers = #tpu.dot_dimension_numbers<[1], [0], [0], [1], [0, 0, 1, 1], [], []>} : vector<32x128xbf16>, vector<128x128xbf16>, vector<32x128xf32> -> vector<32x128xf32>
    %c0_33 = arith.constant 0 : index
    %c0_34 = arith.constant 0 : index
    %50 = vector.load %arg8[%c0_33, %c0_34] : memref<1x128xf32, #tpu.memory_space<vmem>>, vector<1x128xf32>
    %51 = vector.broadcast %50 : vector<1x128xf32> to vector<32x128xf32>
    %52 = arith.addf %49, %51 : vector<32x128xf32>
    %cst_35 = arith.constant 0.000000e+00 : f32
    %53 = vector.broadcast %cst_35 : f32 to vector<32x128xf32>
    %54 = arith.maximumf %52, %53 : vector<32x128xf32>
    %55 = vector.extract_strided_slice %54 {offsets = [0, 0], sizes = [16, 128], strides = [1, 1]} : vector<32x128xf32> to vector<16x128xf32>
    %c0_36 = arith.constant 0 : index
    %c0_37 = arith.constant 0 : index
    %56 = vector.load %arg20[%c0_36, %c0_37] : memref<16x128xf32, #tpu.memory_space<vmem>>, vector<16x128xf32>
    tpu.vector_store %arg20[%c0_36, %c0_37], %55 {strides = array<i32>} : memref<16x128xf32, #tpu.memory_space<vmem>>, vector<16x128xf32>,
    %57 = vector.extract_strided_slice %54 {offsets = [16, 0], sizes = [16, 128], strides = [1, 1]} : vector<32x128xf32> to vector<16x128xf32>
    %c0_38 = arith.constant 0 : index
    %c0_39 = arith.constant 0 : index
    %58 = vector.load %arg22[%c0_38, %c0_39] : memref<16x128xf32, #tpu.memory_space<vmem>>, vector<16x128xf32>
    tpu.vector_store %arg22[%c0_38, %c0_39], %57 {strides = array<i32>} : memref<16x128xf32, #tpu.memory_space<vmem>>, vector<16x128xf32>,
    %59 = arith.truncf %54 : vector<32x128xf32> to vector<32x128xbf16>
    %60 = vector.extract_strided_slice %59 {offsets = [16, 0], sizes = [16, 128], strides = [1, 1]} : vector<32x128xbf16> to vector<16x128xbf16>
    %61 = vector.extract_strided_slice %59 {offsets = [0, 0], sizes = [16, 128], strides = [1, 1]} : vector<32x128xbf16> to vector<16x128xbf16>
    %cst_40 = arith.constant dense<0.000000e+00> : vector<16x16xf32>
    %62 = tpu.matmul %60, %60, %cst_40 {dimension_numbers = #tpu.dot_dimension_numbers<[1], [1], [0], [0], [0, 0, 1, 0], [], []>} : vector<16x128xbf16>, vector<16x128xbf16>, vector<16x16xf32> -> vector<16x16xf32>
    %cst_41 = arith.constant 2.048000e+03 : f32
    %63 = vector.broadcast %cst_41 : f32 to vector<16x16xf32>
    %64 = arith.divf %62, %63 : vector<16x16xf32>
    %cst_42 = arith.constant dense<0.000000e+00> : vector<16x16xf32>
    %65 = tpu.matmul %61, %61, %cst_42 {dimension_numbers = #tpu.dot_dimension_numbers<[1], [1], [0], [0], [0, 0, 1, 0], [], []>} : vector<16x128xbf16>, vector<16x128xbf16>, vector<16x16xf32> -> vector<16x16xf32>
    %cst_43 = arith.constant 2.048000e+03 : f32
    %66 = vector.broadcast %cst_43 : f32 to vector<16x16xf32>
    %67 = arith.divf %65, %66 : vector<16x16xf32>
    %68 = arith.subf %64, %67 : vector<16x16xf32>
    %69 = arith.mulf %68, %68 : vector<16x16xf32>
    %cst_44 = arith.constant dense<0.000000e+00> : vector<16xf32>
    %70 = vector.multi_reduction <add>, %69, %cst_44 [1] : vector<16x16xf32> to vector<16xf32>
    %71 = vector.shape_cast %70 : vector<16xf32> to vector<16x1xf32>
    %cst_45 = arith.constant dense<0.000000e+00> : vector<1xf32>
    %72 = vector.multi_reduction <add>, %71, %cst_45 [0] : vector<16x1xf32> to vector<1xf32>
    %73 = vector.shape_cast %72 : vector<1xf32> to vector<1x1xf32>
    %c0_46 = arith.constant 0 : index
    %c0_47 = arith.constant 0 : index
    %74 = vector.load %arg9[%c0_46, %c0_47] : memref<128x128xbf16, #tpu.memory_space<vmem>>, vector<128x128xbf16>
    %cst_48 = arith.constant dense<0.000000e+00> : vector<32x128xf32>
    %75 = tpu.matmul %59, %74, %cst_48 {dimension_numbers = #tpu.dot_dimension_numbers<[1], [0], [0], [1], [0, 0, 1, 1], [], []>} : vector<32x128xbf16>, vector<128x128xbf16>, vector<32x128xf32> -> vector<32x128xf32>
    %c0_49 = arith.constant 0 : index
    %c0_50 = arith.constant 0 : index
    %76 = vector.load %arg10[%c0_49, %c0_50] : memref<1x128xf32, #tpu.memory_space<vmem>>, vector<1x128xf32>
    %77 = vector.broadcast %76 : vector<1x128xf32> to vector<32x128xf32>
    %78 = arith.addf %75, %77 : vector<32x128xf32>
    %cst_51 = arith.constant 0.000000e+00 : f32
    %79 = vector.broadcast %cst_51 : f32 to vector<32x128xf32>
    %80 = arith.maximumf %78, %79 : vector<32x128xf32>
    %81 = vector.extract_strided_slice %80 {offsets = [0, 0], sizes = [16, 128], strides = [1, 1]} : vector<32x128xf32> to vector<16x128xf32>
    %c0_52 = arith.constant 0 : index
    %c0_53 = arith.constant 0 : index
    %82 = vector.load %arg21[%c0_52, %c0_53] : memref<16x128xf32, #tpu.memory_space<vmem>>, vector<16x128xf32>
    tpu.vector_store %arg21[%c0_52, %c0_53], %81 {strides = array<i32>} : memref<16x128xf32, #tpu.memory_space<vmem>>, vector<16x128xf32>,
    %83 = vector.extract_strided_slice %80 {offsets = [16, 0], sizes = [16, 128], strides = [1, 1]} : vector<32x128xf32> to vector<16x128xf32>
    %c0_54 = arith.constant 0 : index
    %c0_55 = arith.constant 0 : index
    %84 = vector.load %arg23[%c0_54, %c0_55] : memref<16x128xf32, #tpu.memory_space<vmem>>, vector<16x128xf32>
    tpu.vector_store %arg23[%c0_54, %c0_55], %83 {strides = array<i32>} : memref<16x128xf32, #tpu.memory_space<vmem>>, vector<16x128xf32>,
    %85 = arith.truncf %80 : vector<32x128xf32> to vector<32x128xbf16>
    %86 = vector.extract_strided_slice %85 {offsets = [16, 0], sizes = [16, 128], strides = [1, 1]} : vector<32x128xbf16> to vector<16x128xbf16>
    %87 = vector.extract_strided_slice %85 {offsets = [0, 0], sizes = [16, 128], strides = [1, 1]} : vector<32x128xbf16> to vector<16x128xbf16>
    %cst_56 = arith.constant dense<0.000000e+00> : vector<16x16xf32>
    %88 = tpu.matmul %86, %86, %cst_56 {dimension_numbers = #tpu.dot_dimension_numbers<[1], [1], [0], [0], [0, 0, 1, 0], [], []>} : vector<16x128xbf16>, vector<16x128xbf16>, vector<16x16xf32> -> vector<16x16xf32>
    %cst_57 = arith.constant 2.048000e+03 : f32
    %89 = vector.broadcast %cst_57 : f32 to vector<16x16xf32>
    %90 = arith.divf %88, %89 : vector<16x16xf32>
    %cst_58 = arith.constant dense<0.000000e+00> : vector<16x16xf32>
    %91 = tpu.matmul %87, %87, %cst_58 {dimension_numbers = #tpu.dot_dimension_numbers<[1], [1], [0], [0], [0, 0, 1, 0], [], []>} : vector<16x128xbf16>, vector<16x128xbf16>, vector<16x16xf32> -> vector<16x16xf32>
    %cst_59 = arith.constant 2.048000e+03 : f32
    %92 = vector.broadcast %cst_59 : f32 to vector<16x16xf32>
    %93 = arith.divf %91, %92 : vector<16x16xf32>
    %94 = arith.subf %90, %93 : vector<16x16xf32>
    %95 = arith.mulf %94, %94 : vector<16x16xf32>
    %cst_60 = arith.constant dense<0.000000e+00> : vector<16xf32>
    %96 = vector.multi_reduction <add>, %95, %cst_60 [1] : vector<16x16xf32> to vector<16xf32>
    %97 = vector.shape_cast %96 : vector<16xf32> to vector<16x1xf32>
    %cst_61 = arith.constant dense<0.000000e+00> : vector<1xf32>
    %98 = vector.multi_reduction <add>, %97, %cst_61 [0] : vector<16x1xf32> to vector<1xf32>
    %99 = vector.shape_cast %98 : vector<1xf32> to vector<1x1xf32>
    %100 = arith.addf %73, %99 : vector<1x1xf32>
    %101 = arith.truncf %33 : vector<32x128xf32> to vector<32x128xbf16>
    %c0_62 = arith.constant 0 : index
    %c0_63 = arith.constant 0 : index
    %102 = vector.load %arg11[%c0_62, %c0_63] : memref<128x128xbf16, #tpu.memory_space<vmem>>, vector<128x128xbf16>
    %cst_64 = arith.constant dense<0.000000e+00> : vector<32x128xf32>
    %103 = tpu.matmul %101, %102, %cst_64 {dimension_numbers = #tpu.dot_dimension_numbers<[1], [0], [0], [1], [0, 0, 1, 1], [], []>} : vector<32x128xbf16>, vector<128x128xbf16>, vector<32x128xf32> -> vector<32x128xf32>
    %c0_65 = arith.constant 0 : index
    %c0_66 = arith.constant 0 : index
    %104 = vector.load %arg12[%c0_65, %c0_66] : memref<128x128xbf16, #tpu.memory_space<vmem>>, vector<128x128xbf16>
    %cst_67 = arith.constant dense<0.000000e+00> : vector<32x128xf32>
    %105 = tpu.matmul %85, %104, %cst_67 {dimension_numbers = #tpu.dot_dimension_numbers<[1], [0], [0], [1], [0, 0, 1, 1], [], []>} : vector<32x128xbf16>, vector<128x128xbf16>, vector<32x128xf32> -> vector<32x128xf32>
    %106 = arith.addf %103, %105 : vector<32x128xf32>
    %c0_68 = arith.constant 0 : index
    %c0_69 = arith.constant 0 : index
    %107 = vector.load %arg13[%c0_68, %c0_69] : memref<1x128xf32, #tpu.memory_space<vmem>>, vector<1x128xf32>
    %108 = vector.broadcast %107 : vector<1x128xf32> to vector<32x128xf32>
    %109 = arith.addf %106, %108 : vector<32x128xf32>
    %cst_70 = arith.constant 0.000000e+00 : f32
    %110 = vector.broadcast %cst_70 : f32 to vector<32x128xf32>
    %111 = arith.maximumf %109, %110 : vector<32x128xf32>
    %112 = arith.truncf %111 : vector<32x128xf32> to vector<32x128xbf16>
    %c0_71 = arith.constant 0 : index
    %c0_72 = arith.constant 0 : index
    %113 = vector.load %arg14[%c0_71, %c0_72] : memref<128x128xbf16, #tpu.memory_space<vmem>>, vector<128x128xbf16>
    %cst_73 = arith.constant dense<0.000000e+00> : vector<32x128xf32>
    %114 = tpu.matmul %112, %113, %cst_73 {dimension_numbers = #tpu.dot_dimension_numbers<[1], [0], [0], [1], [0, 0, 1, 1], [], []>} : vector<32x128xbf16>, vector<128x128xbf16>, vector<32x128xf32> -> vector<32x128xf32>
    %c0_74 = arith.constant 0 : index
    %c0_75 = arith.constant 0 : index
    %115 = vector.load %arg15[%c0_74, %c0_75] : memref<1x128xf32, #tpu.memory_space<vmem>>, vector<1x128xf32>
    %116 = vector.broadcast %115 : vector<1x128xf32> to vector<32x128xf32>
    %117 = arith.addf %114, %116 : vector<32x128xf32>
    %118 = vector.extract_strided_slice %117 {offsets = [0, 0], sizes = [16, 128], strides = [1, 1]} : vector<32x128xf32> to vector<16x128xf32>
    %119 = vector.extract_strided_slice %117 {offsets = [16, 0], sizes = [16, 128], strides = [1, 1]} : vector<32x128xf32> to vector<16x128xf32>
    %c0_76 = arith.constant 0 : index
    %c0_77 = arith.constant 0 : index
    %120 = vector.load %arg24[%c0_76, %c0_77] : memref<16x128xf32, #tpu.memory_space<vmem>>, vector<16x128xf32>
    tpu.vector_store %arg24[%c0_76, %c0_77], %118 {strides = array<i32>} : memref<16x128xf32, #tpu.memory_space<vmem>>, vector<16x128xf32>,
    %c0_78 = arith.constant 0 : index
    %c0_79 = arith.constant 0 : index
    %121 = vector.load %arg25[%c0_78, %c0_79] : memref<16x128xf32, #tpu.memory_space<vmem>>, vector<16x128xf32>
    tpu.vector_store %arg25[%c0_78, %c0_79], %119 {strides = array<i32>} : memref<16x128xf32, #tpu.memory_space<vmem>>, vector<16x128xf32>,
    %122 = arith.mulf %118, %119 : vector<16x128xf32>
    %cst_80 = arith.constant dense<0.000000e+00> : vector<16xf32>
    %123 = vector.multi_reduction <add>, %122, %cst_80 [1] : vector<16x128xf32> to vector<16xf32>
    %124 = vector.shape_cast %123 : vector<16xf32> to vector<16x1xf32>
    %125 = arith.mulf %118, %118 : vector<16x128xf32>
    %cst_81 = arith.constant dense<0.000000e+00> : vector<16xf32>
    %126 = vector.multi_reduction <add>, %125, %cst_81 [1] : vector<16x128xf32> to vector<16xf32>
    %127 = vector.shape_cast %126 : vector<16xf32> to vector<16x1xf32>
    %128 = arith.mulf %119, %119 : vector<16x128xf32>
    %cst_82 = arith.constant dense<0.000000e+00> : vector<16xf32>
    %129 = vector.multi_reduction <add>, %128, %cst_82 [1] : vector<16x128xf32> to vector<16xf32>
    %130 = vector.shape_cast %129 : vector<16xf32> to vector<16x1xf32>
    %cst_83 = arith.constant 1.000000e-16 : f32
    %131 = vector.broadcast %cst_83 : f32 to vector<16x1xf32>
    %132 = arith.maximumf %127, %131 : vector<16x1xf32>
    %133 = math.rsqrt %132 : vector<16x1xf32>
    %134 = arith.mulf %124, %133 : vector<16x1xf32>
    %cst_84 = arith.constant 1.000000e-16 : f32
    %135 = vector.broadcast %cst_84 : f32 to vector<16x1xf32>
    %136 = arith.maximumf %130, %135 : vector<16x1xf32>
    %137 = math.rsqrt %136 : vector<16x1xf32>
    %138 = arith.mulf %134, %137 : vector<16x1xf32>
    %cst_85 = arith.constant dense<0.000000e+00> : vector<1xf32>
    %139 = vector.multi_reduction <add>, %138, %cst_85 [0] : vector<16x1xf32> to vector<1xf32>
    %140 = vector.shape_cast %139 : vector<1xf32> to vector<1x1xf32>
    %cst_86 = arith.constant 1.600000e+01 : f32
    %141 = vector.broadcast %cst_86 : f32 to vector<1x1xf32>
    %142 = arith.divf %140, %141 : vector<1x1xf32>
    %cst_87 = arith.constant 1.000000e+00 : f32
    %143 = vector.broadcast %cst_87 : f32 to vector<1x1xf32>
    %144 = arith.subf %143, %142 : vector<1x1xf32>
    %145 = arith.mulf %118, %0 : vector<16x128xf32>
    %cst_88 = arith.constant dense<0.000000e+00> : vector<16xf32>
    %146 = vector.multi_reduction <add>, %145, %cst_88 [1] : vector<16x128xf32> to vector<16xf32>
    %147 = vector.shape_cast %146 : vector<16xf32> to vector<16x1xf32>
    %148 = arith.mulf %118, %118 : vector<16x128xf32>
    %cst_89 = arith.constant dense<0.000000e+00> : vector<16xf32>
    %149 = vector.multi_reduction <add>, %148, %cst_89 [1] : vector<16x128xf32> to vector<16xf32>
    %150 = vector.shape_cast %149 : vector<16xf32> to vector<16x1xf32>
    %151 = arith.mulf %0, %0 : vector<16x128xf32>
    %cst_90 = arith.constant dense<0.000000e+00> : vector<16xf32>
    %152 = vector.multi_reduction <add>, %151, %cst_90 [1] : vector<16x128xf32> to vector<16xf32>
    %153 = vector.shape_cast %152 : vector<16xf32> to vector<16x1xf32>
    %cst_91 = arith.constant 1.000000e-16 : f32
    %154 = vector.broadcast %cst_91 : f32 to vector<16x1xf32>
    %155 = arith.maximumf %150, %154 : vector<16x1xf32>
    %156 = math.rsqrt %155 : vector<16x1xf32>
    %157 = arith.mulf %147, %156 : vector<16x1xf32>
    %cst_92 = arith.constant 1.000000e-16 : f32
    %158 = vector.broadcast %cst_92 : f32 to vector<16x1xf32>
    %159 = arith.maximumf %153, %158 : vector<16x1xf32>
    %160 = math.rsqrt %159 : vector<16x1xf32>
    %161 = arith.mulf %157, %160 : vector<16x1xf32>
    %cst_93 = arith.constant dense<0.000000e+00> : vector<1xf32>
    %162 = vector.multi_reduction <add>, %161, %cst_93 [0] : vector<16x1xf32> to vector<1xf32>
    %163 = vector.shape_cast %162 : vector<1xf32> to vector<1x1xf32>
    %cst_94 = arith.constant 1.600000e+01 : f32
    %164 = vector.broadcast %cst_94 : f32 to vector<1x1xf32>
    %165 = arith.divf %163, %164 : vector<1x1xf32>
    %cst_95 = arith.constant 1.000000e+00 : f32
    %166 = vector.broadcast %cst_95 : f32 to vector<1x1xf32>
    %167 = arith.subf %166, %165 : vector<1x1xf32>
    %168 = arith.addf %144, %167 : vector<1x1xf32>
    %169 = tpu.iota {dimensions = array<i32: 1>} : vector<1x128xi32>
    %c0_i32 = arith.constant 0 : i32
    %170 = vector.broadcast %c0_i32 : i32 to vector<1x128xi32>
    %171 = arith.cmpi eq, %169, %170 : vector<1x128xi32>
    %cst_96 = arith.constant 0.000000e+00 : f32
    %172 = vector.shape_cast %168 : vector<1x1xf32> to vector<1x1xf32>
    %173 = vector.broadcast %172 : vector<1x1xf32> to vector<1x128xf32>
    %174 = vector.broadcast %cst_96 : f32 to vector<1x128xf32>
    %175 = arith.select %171, %173, %174 : vector<1x128xi1>, vector<1x128xf32>
    %c1_i32 = arith.constant 1 : i32
    %176 = vector.broadcast %c1_i32 : i32 to vector<1x128xi32>
    %177 = arith.cmpi eq, %169, %176 : vector<1x128xi32>
    %cst_97 = arith.constant 0.000000e+00 : f32
    %178 = vector.shape_cast %46 : vector<1x1xf32> to vector<1x1xf32>
    %179 = vector.broadcast %178 : vector<1x1xf32> to vector<1x128xf32>
    %180 = vector.broadcast %cst_97 : f32 to vector<1x128xf32>
    %181 = arith.select %177, %179, %180 : vector<1x128xi1>, vector<1x128xf32>
    %182 = arith.addf %175, %181 : vector<1x128xf32>
    %c2_i32 = arith.constant 2 : i32
    %183 = vector.broadcast %c2_i32 : i32 to vector<1x128xi32>
    %184 = arith.cmpi eq, %169, %183 : vector<1x128xi32>
    %cst_98 = arith.constant 0.000000e+00 : f32
    %185 = vector.shape_cast %100 : vector<1x1xf32> to vector<1x1xf32>
    %186 = vector.broadcast %185 : vector<1x1xf32> to vector<1x128xf32>
    %187 = vector.broadcast %cst_98 : f32 to vector<1x128xf32>
    %188 = arith.select %184, %186, %187 : vector<1x128xi1>, vector<1x128xf32>
    %189 = arith.addf %182, %188 : vector<1x128xf32>
    %c3_i32 = arith.constant 3 : i32
    %190 = vector.broadcast %c3_i32 : i32 to vector<1x128xi32>
    %191 = arith.cmpi eq, %169, %190 : vector<1x128xi32>
    %cst_99 = arith.constant 0.000000e+00 : f32
    %192 = vector.shape_cast %168 : vector<1x1xf32> to vector<1x1xf32>
    %193 = vector.broadcast %192 : vector<1x1xf32> to vector<1x128xf32>
    %194 = vector.broadcast %cst_99 : f32 to vector<1x128xf32>
    %195 = arith.select %191, %193, %194 : vector<1x128xi1>, vector<1x128xf32>
    %196 = arith.addf %189, %195 : vector<1x128xf32>
    %c0_100 = arith.constant 0 : index
    %c0_101 = arith.constant 0 : index
    %197 = vector.load %arg26[%c0_100, %c0_101] : memref<1x128xf32, #tpu.memory_space<vmem>>, vector<1x128xf32>
    tpu.vector_store %arg26[%c0_100, %c0_101], %196 {strides = array<i32>} : memref<1x128xf32, #tpu.memory_space<vmem>>, vector<1x128xf32>,
    return
  }
}

</mosaic_0001>

<llo_original>
// kernel: _gimvi_step_impl.1
$region0: #{_gimvi_step_impl.1}
  #allocation0 [shape = 'u32[]', space=smem, size = 0x4, offset = 0x4, fixed_abs, tag = 'smem constant byte address 0x4 - core index']
  #allocation1 [shape = 'u32[144,128]{1,0:T(1,128)}', space=vmem, size = 0x12000, scoped, tag = 'internal scratch']
  %s0 = inlined_call_operand.vmem [shape: f32[16,128], index: 0, kind: input, shape index: {}]
  %s1 = inlined_call_operand.hbm [shape: f32[16,128], index: 1, kind: input, shape index: {}]
  %s2 = inlined_call_operand.hbm [shape: f32[16,128], index: 2, kind: input, shape index: {}]
  %s3 = inlined_call_operand.hbm [shape: bf16[128,128], index: 3, kind: input, shape index: {}]
  %s4 = inlined_call_operand.vmem [shape: f32[1,128], index: 4, kind: input, shape index: {}]
  %s5 = inlined_call_operand.hbm [shape: bf16[128,128], index: 5, kind: input, shape index: {}]
  %s6 = inlined_call_operand.vmem [shape: f32[1,128], index: 6, kind: input, shape index: {}]
  %s7 = inlined_call_operand.hbm [shape: bf16[128,128], index: 7, kind: input, shape index: {}]
  %s8 = inlined_call_operand.vmem [shape: f32[1,128], index: 8, kind: input, shape index: {}]
  %s9 = inlined_call_operand.hbm [shape: bf16[128,128], index: 9, kind: input, shape index: {}]
  %s10 = inlined_call_operand.vmem [shape: f32[1,128], index: 10, kind: input, shape index: {}]
  %s11 = inlined_call_operand.hbm [shape: bf16[128,128], index: 11, kind: input, shape index: {}]
  %s12 = inlined_call_operand.hbm [shape: bf16[128,128], index: 12, kind: input, shape index: {}]
  %s13 = inlined_call_operand.vmem [shape: f32[1,128], index: 13, kind: input, shape index: {}]
  %s14 = inlined_call_operand.hbm [shape: bf16[128,128], index: 14, kind: input, shape index: {}]
  %s15 = inlined_call_operand.vmem [shape: f32[1,128], index: 15, kind: input, shape index: {}]
  %s16 = inlined_call_operand.hbm [shape: f32[16,128], index: 16, kind: output, shape index: {0}]
  %s17 = inlined_call_operand.hbm [shape: f32[16,128], index: 17, kind: output, shape index: {1}]
  %s18 = inlined_call_operand.hbm [shape: f32[16,128], index: 18, kind: output, shape index: {2}]
  %s19 = inlined_call_operand.hbm [shape: f32[16,128], index: 19, kind: output, shape index: {3}]
  %s20 = inlined_call_operand.hbm [shape: f32[16,128], index: 20, kind: output, shape index: {4}]
  %s21 = inlined_call_operand.hbm [shape: f32[16,128], index: 21, kind: output, shape index: {5}]
  %s22 = inlined_call_operand.hbm [shape: f32[16,128], index: 22, kind: output, shape index: {6}]
  %s23 = inlined_call_operand.hbm [shape: f32[16,128], index: 23, kind: output, shape index: {7}]
  %s24 = inlined_call_operand.hbm [shape: f32[16,128], index: 24, kind: output, shape index: {8}]
  %s25 = inlined_call_operand.hbm [shape: f32[16,128], index: 25, kind: output, shape index: {9}]
  %s26 = inlined_call_operand.vmem [shape: f32[1,128], index: 26, kind: output, shape index: {10}]
  %27 = xla_tuple %s16, %s17, %s18, %s19, %s20, %s21, %s22, %s23, %s24, %s25, %s26
  %s28 = sld [smem:[#allocation0]]
  $region190: #{_gimvi_step_impl.1} parent=0
    _
  %s30 = ssub.s32 1, %s28
  %s31 = scalar_select 0, %s30, %s28
  $region1: #{_gimvi_step_impl.1} parent=0
    #allocation2 [shape = 'u8[8192]{0}', space=vmem, size = 0x2000, scoped, tag = 'input window, operand 1, single buffered']
    #allocation3 [shape = 's32[1]{0}', space=sflag, size = 0x4, scoped, tag = 'scoped memory for _gimvi_step_impl.1']
    #allocation4 [shape = 's32[1]{0}', space=sflag, size = 0x4, scoped, tag = 'scoped memory for _gimvi_step_impl.1']
    #allocation5 [shape = 'u8[8192]{0}', space=vmem, size = 0x2000, scoped, tag = 'input window, operand 2, single buffered']
    #allocation6 [shape = 's32[1]{0}', space=sflag, size = 0x4, scoped, tag = 'scoped memory for _gimvi_step_impl.1']
    #allocation7 [shape = 'u8[32768]{0}', space=vmem, size = 0x8000, scoped, tag = 'input window, operand 3, single buffered']
    #allocation8 [shape = 'u8[32768]{0}', space=vmem, size = 0x8000, scoped, tag = 'input window, operand 5, single buffered']
    #allocation9 [shape = 's32[1]{0}', space=sflag, size = 0x4, scoped, tag = 'scoped memory for _gimvi_step_impl.1']
    #allocation10 [shape = 'u8[32768]{0}', space=vmem, size = 0x8000, scoped, tag = 'input window, operand 7, single buffered']
    #allocation11 [shape = 'u8[32768]{0}', space=vmem, size = 0x8000, scoped, tag = 'input window, operand 9, single buffered']
    #allocation12 [shape = 's32[1]{0}', space=sflag, size = 0x4, scoped, tag = 'scoped memory for _gimvi_step_impl.1']
    #allocation13 [shape = 'u8[32768]{0}', space=vmem, size = 0x8000, scoped, tag = 'input window, operand 11, single buffered']
    #allocation14 [shape = 'u8[32768]{0}', space=vmem, size = 0x8000, scoped, tag = 'input window, operand 12, single buffered']
    #allocation15 [shape = 's32[1]{0}', space=sflag, size = 0x4, scoped, tag = 'scoped memory for _gimvi_step_impl.1']
    #allocation16 [shape = 'u8[32768]{0}', space=vmem, size = 0x8000, scoped, tag = 'input window, operand 14, single buffered']
    #allocation17 [shape = 'u8[8192]{0}', space=vmem, size = 0x2000, scoped, tag = 'output window, operand 0, single buffered']
    #allocation18 [shape = 'u8[8192]{0}', space=vmem, size = 0x2000, scoped, tag = 'output window, operand 1, single buffered']
    #allocation19 [shape = 's32[1]{0}', space=sflag, size = 0x4, scoped, tag = 'scoped memory for _gimvi_step_impl.1']
    #allocation20 [shape = 'u8[8192]{0}', space=vmem, size = 0x2000, scoped, tag = 'output window, operand 2, single buffered']
    #allocation21 [shape = 'u8[8192]{0}', space=vmem, size = 0x2000, scoped, tag = 'output window, operand 3, single buffered']
    #allocation22 [shape = 's32[1]{0}', space=sflag, size = 0x4, scoped, tag = 'scoped memory for _gimvi_step_impl.1']
    #allocation23 [shape = 'u8[8192]{0}', space=vmem, size = 0x2000, scoped, tag = 'output window, operand 4, single buffered']
    #allocation24 [shape = 'u8[8192]{0}', space=vmem, size = 0x2000, scoped, tag = 'output window, operand 5, single buffered']
    #allocation25 [shape = 's32[1]{0}', space=sflag, size = 0x4, scoped, tag = 'scoped memory for _gimvi_step_impl.1']
    #allocation26 [shape = 'u8[8192]{0}', space=vmem, size = 0x2000, scoped, tag = 'output window, operand 6, single buffered']
    #allocation27 [shape = 'u8[8192]{0}', space=vmem, size = 0x2000, scoped, tag = 'output window, operand 7, single buffered']
    #allocation28 [shape = 's32[1]{0}', space=sflag, size = 0x4, scoped, tag = 'scoped memory for _gimvi_step_impl.1']
    #allocation29 [shape = 'u8[8192]{0}', space=vmem, size = 0x2000, scoped, tag = 'output window, operand 8, single buffered']
    #allocation30 [shape = 'u8[8192]{0}', space=vmem, size = 0x2000, scoped, tag = 'output window, operand 9, single buffered']
    #allocation31 [shape = 's32[1]{0}', space=sflag, size = 0x4, scoped, tag = 'scoped memory for _gimvi_step_impl.1']
    %32 = vsyncpa [#allocation3], 0
    %33 = vsyncpa [#allocation6], 0
    %34 = vsyncpa [#allocation9], 0
    %35 = vsyncpa [#allocation12], 0
    %36 = vsyncpa [#allocation15], 0
    %37 = vsyncpa [#allocation4], 0
    %38 = vsyncpa [#allocation19], 0
    %39 = vsyncpa [#allocation22], 0
    %40 = vsyncpa [#allocation25], 0
    %41 = vsyncpa [#allocation28], 0
    %42 = vsyncpa [#allocation31], 0
    // Predicated region
    $region2: #{_gimvi_step_impl.1} parent=1 // pred_check
      _
    $region3: #{_gimvi_step_impl.1} parent=1 // pred_check_branch
      %44 = sbr.rel (0) target = $region5
    $region4: #{_gimvi_step_impl.1} parent=1 // pred_region
      _
    $region5: #{_gimvi_step_impl.1} parent=1 // pred_fallthru
      _
    // Predicated region
    $region6: #{_gimvi_step_impl.1} parent=1 // pred_check
      _
    $region7: #{_gimvi_step_impl.1} parent=1 // pred_check_branch
      %46 = sbr.rel (0) target = $region9
    $region8: #{_gimvi_step_impl.1} parent=1 // pred_region
      %s48 = ssub.s32 256, 256
      %49 = vsyncadd [#allocation3], %s48
      %s50 = sshll.u32 [#allocation2], 4
      %s51 = int_to_ptr.vmem [resolvable:$true] %s50
      %56 = dma.hbm_to_vmem [thread:$0]  %s1, 256, %s51, [#allocation3], 128, 128, 8
    $region9: #{_gimvi_step_impl.1} parent=1 // pred_fallthru
      _
    // Predicated region
    $region10: #{_gimvi_step_impl.1} parent=1 // pred_check
      _
    $region11: #{_gimvi_step_impl.1} parent=1 // pred_check_branch
      %58 = sbr.rel (0) target = $region13
    $region12: #{_gimvi_step_impl.1} parent=1 // pred_region
      %s60 = ssub.s32 256, 256
      %61 = vsyncadd [#allocation6], %s60
      %s62 = sshll.u32 [#allocation5], 4
      %s63 = int_to_ptr.vmem [resolvable:$true] %s62
      %68 = dma.hbm_to_vmem [thread:$0]  %s2, 256, %s63, [#allocation6], 128, 128, 8
    $region13: #{_gimvi_step_impl.1} parent=1 // pred_fallthru
      _
    // Predicated region
    $region14: #{_gimvi_step_impl.1} parent=1 // pred_check
      _
    $region15: #{_gimvi_step_impl.1} parent=1 // pred_check_branch
      %70 = sbr.rel (0) target = $region17
    $region16: #{_gimvi_step_impl.1} parent=1 // pred_region
      %s72 = ssub.s32 1024, 1024
      %73 = vsyncadd [#allocation6], %s72
      %s74 = sshll.u32 [#allocation7], 4
      %s75 = int_to_ptr.vmem [resolvable:$true] %s74
      %80 = dma.hbm_to_vmem [thread:$0]  %s3, 1024, %s75, [#allocation6], 64, 64, 4
    $region17: #{_gimvi_step_impl.1} parent=1 // pred_fallthru
      _
    // Predicated region
    $region18: #{_gimvi_step_impl.1} parent=1 // pred_check
      _
    $region19: #{_gimvi_step_impl.1} parent=1 // pred_check_branch
      %82 = sbr.rel (0) target = $region21
    $region20: #{_gimvi_step_impl.1} parent=1 // pred_region
      _
    $region21: #{_gimvi_step_impl.1} parent=1 // pred_fallthru
      _
    // Predicated region
    $region22: #{_gimvi_step_impl.1} parent=1 // pred_check
      _
    $region23: #{_gimvi_step_impl.1} parent=1 // pred_check_branch
      %84 = sbr.rel (0) target = $region25
    $region24: #{_gimvi_step_impl.1} parent=1 // pred_region
      %s86 = ssub.s32 1024, 1024
      %87 = vsyncadd [#allocation9], %s86
      %s88 = sshll.u32 [#allocation8], 4
      %s89 = int_to_ptr.vmem [resolvable:$true] %s88
      %94 = dma.hbm_to_vmem [thread:$0]  %s5, 1024, %s89, [#allocation9], 64, 64, 4
    $region25: #{_gimvi_step_impl.1} parent=1 // pred_fallthru
      _
    // Predicated region
    $region26: #{_gimvi_step_impl.1} parent=1 // pred_check
      _
    $region27: #{_gimvi_step_impl.1} parent=1 // pred_check_branch
      %96 = sbr.rel (0) target = $region29
    $region28: #{_gimvi_step_impl.1} parent=1 // pred_region
      _
    $region29: #{_gimvi_step_impl.1} parent=1 // pred_fallthru
      _
    // Predicated region
    $region30: #{_gimvi_step_impl.1} parent=1 // pred_check
      _
    $region31: #{_gimvi_step_impl.1} parent=1 // pred_check_branch
      %98 = sbr.rel (0) target = $region33
    $region32: #{_gimvi_step_impl.1} parent=1 // pred_region
      %s100 = ssub.s32 1024, 1024
      %101 = vsyncadd [#allocation9], %s100
      %s102 = sshll.u32 [#allocation10], 4
      %s103 = int_to_ptr.vmem [resolvable:$true] %s102
      %108 = dma.hbm_to_vmem [thread:$0]  %s7, 1024, %s103, [#allocation9], 64, 64, 4
    $region33: #{_gimvi_step_impl.1} parent=1 // pred_fallthru
      _
    // Predicated region
    $region34: #{_gimvi_step_impl.1} parent=1 // pred_check
      _
    $region35: #{_gimvi_step_impl.1} parent=1 // pred_check_branch
      %110 = sbr.rel (0) target = $region37
    $region36: #{_gimvi_step_impl.1} parent=1 // pred_region
      _
    $region37: #{_gimvi_step_impl.1} parent=1 // pred_fallthru
      _
    // Predicated region
    $region38: #{_gimvi_step_impl.1} parent=1 // pred_check
      _
    $region39: #{_gimvi_step_impl.1} parent=1 // pred_check_branch
      %112 = sbr.rel (0) target = $region41
    $region40: #{_gimvi_step_impl.1} parent=1 // pred_region
      %s114 = ssub.s32 1024, 1024
      %115 = vsyncadd [#allocation12], %s114
      %s116 = sshll.u32 [#allocation11], 4
      %s117 = int_to_ptr.vmem [resolvable:$true] %s116
      %122 = dma.hbm_to_vmem [thread:$0]  %s9, 1024, %s117, [#allocation12], 64, 64, 4
    $region41: #{_gimvi_step_impl.1} parent=1 // pred_fallthru
      _
    // Predicated region
    $region42: #{_gimvi_step_impl.1} parent=1 // pred_check
      _
    $region43: #{_gimvi_step_impl.1} parent=1 // pred_check_branch
      %124 = sbr.rel (0) target = $region45
    $region44: #{_gimvi_step_impl.1} parent=1 // pred_region
      _
    $region45: #{_gimvi_step_impl.1} parent=1 // pred_fallthru
      _
    // Predicated region
    $region46: #{_gimvi_step_impl.1} parent=1 // pred_check
      _
    $region47: #{_gimvi_step_impl.1} parent=1 // pred_check_branch
      %126 = sbr.rel (0) target = $region49
    $region48: #{_gimvi_step_impl.1} parent=1 // pred_region
      %s128 = ssub.s32 1024, 1024
      %129 = vsyncadd [#allocation12], %s128
      %s130 = sshll.u32 [#allocation13], 4
      %s131 = int_to_ptr.vmem [resolvable:$true] %s130
      %136 = dma.hbm_to_vmem [thread:$0]  %s11, 1024, %s131, [#allocation12], 64, 64, 4
    $region49: #{_gimvi_step_impl.1} parent=1 // pred_fallthru
      _
    // Predicated region
    $region50: #{_gimvi_step_impl.1} parent=1 // pred_check
      _
    $region51: #{_gimvi_step_impl.1} parent=1 // pred_check_branch
      %138 = sbr.rel (0) target = $region53
    $region52: #{_gimvi_step_impl.1} parent=1 // pred_region
      %s140 = ssub.s32 1024, 1024
      %141 = vsyncadd [#allocation15], %s140
      %s142 = sshll.u32 [#allocation14], 4
      %s143 = int_to_ptr.vmem [resolvable:$true] %s142
      %148 = dma.hbm_to_vmem [thread:$0]  %s12, 1024, %s143, [#allocation15], 64, 64, 4
    $region53: #{_gimvi_step_impl.1} parent=1 // pred_fallthru
      _
    // Predicated region
    $region54: #{_gimvi_step_impl.1} parent=1 // pred_check
      _
    $region55: #{_gimvi_step_impl.1} parent=1 // pred_check_branch
      %150 = sbr.rel (0) target = $region57
    $region56: #{_gimvi_step_impl.1} parent=1 // pred_region
      _
    $region57: #{_gimvi_step_impl.1} parent=1 // pred_fallthru
      _
    // Predicated region
    $region58: #{_gimvi_step_impl.1} parent=1 // pred_check
      _
    $region59: #{_gimvi_step_impl.1} parent=1 // pred_check_branch
      %152 = sbr.rel (0) target = $region61
    $region60: #{_gimvi_step_impl.1} parent=1 // pred_region
      %s154 = ssub.s32 1024, 1024
      %155 = vsyncadd [#allocation15], %s154
      %s156 = sshll.u32 [#allocation16], 4
      %s157 = int_to_ptr.vmem [resolvable:$true] %s156
      %162 = dma.hbm_to_vmem [thread:$0]  %s14, 1024, %s157, [#allocation15], 64, 64, 4
    $region61: #{_gimvi_step_impl.1} parent=1 // pred_fallthru
      _
    // Predicated region
    $region62: #{_gimvi_step_impl.1} parent=1 // pred_check
      _
    $region63: #{_gimvi_step_impl.1} parent=1 // pred_check_branch
      %164 = sbr.rel (0) target = $region65
    $region64: #{_gimvi_step_impl.1} parent=1 // pred_region
      _
    $region65: #{_gimvi_step_impl.1} parent=1 // pred_fallthru
      _
    // Predicated region
    $region66: #{_gimvi_step_impl.1} parent=1 // pred_check
      _
    $region67: #{_gimvi_step_impl.1} parent=1 // pred_check_branch
      %166 = sbr.rel (0) target = $region69
    $region68: #{_gimvi_step_impl.1} parent=1 // pred_region
      %167 = dma.done [#allocation3], 256
    $region69: #{_gimvi_step_impl.1} parent=1 // pred_fallthru
      _
    // Predicated region
    $region70: #{_gimvi_step_impl.1} parent=1 // pred_check
      _
    $region71: #{_gimvi_step_impl.1} parent=1 // pred_check_branch
      %169 = sbr.rel (0) target = $region73
    $region72: #{_gimvi_step_impl.1} parent=1 // pred_region
      %170 = dma.done [#allocation6], 256
    $region73: #{_gimvi_step_impl.1} parent=1 // pred_fallthru
      _
    // Predicated region
    $region74: #{_gimvi_step_impl.1} parent=1 // pred_check
      _
    $region75: #{_gimvi_step_impl.1} parent=1 // pred_check_branch
      %172 = sbr.rel (0) target = $region77
    $region76: #{_gimvi_step_impl.1} parent=1 // pred_region
      %173 = dma.done [#allocation6], 1024
    $region77: #{_gimvi_step_impl.1} parent=1 // pred_fallthru
      _
    // Predicated region
    $region78: #{_gimvi_step_impl.1} parent=1 // pred_check
      _
    $region79: #{_gimvi_step_impl.1} parent=1 // pred_check_branch
      %175 = sbr.rel (0) target = $region81
    $region80: #{_gimvi_step_impl.1} parent=1 // pred_region
      %176 = dma.done [#allocation9], 1024
    $region81: #{_gimvi_step_impl.1} parent=1 // pred_fallthru
      _
    // Predicated region
    $region82: #{_gimvi_step_impl.1} parent=1 // pred_check
      _
    $region83: #{_gimvi_step_impl.1} parent=1 // pred_check_branch
      %178 = sbr.rel (0) target = $region85
    $region84: #{_gimvi_step_impl.1} parent=1 // pred_region
      %179 = dma.done [#allocation9], 1024
    $region85: #{_gimvi_step_impl.1} parent=1 // pred_fallthru
      _
    // Predicated region
    $region86: #{_gimvi_step_impl.1} parent=1 // pred_check
      _
    $region87: #{_gimvi_step_impl.1} parent=1 // pred_check_branch
      %181 = sbr.rel (0) target = $region89
    $region88: #{_gimvi_step_impl.1} parent=1 // pred_region
      %182 = dma.done [#allocation12], 1024
    $region89: #{_gimvi_step_impl.1} parent=1 // pred_fallthru
      _
    // Predicated region
    $region90: #{_gimvi_step_impl.1} parent=1 // pred_check
      _
    $region91: #{_gimvi_step_impl.1} parent=1 // pred_check_branch
      %184 = sbr.rel (0) target = $region93
    $region92: #{_gimvi_step_impl.1} parent=1 // pred_region
      %185 = dma.done [#allocation12], 1024
    $region93: #{_gimvi_step_impl.1} parent=1 // pred_fallthru
      _
    // Predicated region
    $region94: #{_gimvi_step_impl.1} parent=1 // pred_check
      _
    $region95: #{_gimvi_step_impl.1} parent=1 // pred_check_branch
      %187 = sbr.rel (0) target = $region97
    $region96: #{_gimvi_step_impl.1} parent=1 // pred_region
      %188 = dma.done [#allocation15], 1024
    $region97: #{_gimvi_step_impl.1} parent=1 // pred_fallthru
      _
    // Predicated region
    $region98: #{_gimvi_step_impl.1} parent=1 // pred_check
      _
    $region99: #{_gimvi_step_impl.1} parent=1 // pred_check_branch
      %190 = sbr.rel (0) target = $region101
    $region100: #{_gimvi_step_impl.1} parent=1 // pred_region
      %191 = dma.done [#allocation15], 1024
    $region101: #{_gimvi_step_impl.1} parent=1 // pred_fallthru
      _
    %v193 = vld [vmem:[#allocation2] sm:$0xff]
    %v194 = vld [vmem:[#allocation2 + $0x8] sm:$0xff]
    %v195 = vpack.c.bf16 %v194, %v193
    %v196 = vld [vmem:[%s0] sm:$0xff]
    %v197 = vld [vmem:[%s0 + $0x8] sm:$0xff]
    %v198 = vpack.c.bf16 %v197, %v196
    %v199 = vld [vmem:[#allocation5] sm:$0xff]
    %v200 = vld [vmem:[#allocation5 + $0x8] sm:$0xff]
    %v201 = vpack.c.bf16 %v200, %v199
    %v202 = vld [vmem:[#allocation7] sm:$0xf]
    %v203 = vld [vmem:[#allocation7 + $0x4] sm:$0xf]
    %v204 = vld [vmem:[#allocation7 + $0x8] sm:$0xf]
    %v205 = vld [vmem:[#allocation7 + $0xc] sm:$0xf]
    %v206 = vld [vmem:[#allocation7 + $0x10] sm:$0xf]
    %v207 = vld [vmem:[#allocation7 + $0x14] sm:$0xf]
    %v208 = vld [vmem:[#allocation7 + $0x18] sm:$0xf]
    %v209 = vld [vmem:[#allocation7 + $0x1c] sm:$0xf]
    %v210 = vld [vmem:[#allocation7 + $0x20] sm:$0xf]
    %v211 = vld [vmem:[#allocation7 + $0x24] sm:$0xf]
    %v212 = vld [vmem:[#allocation7 + $0x28] sm:$0xf]
    %v213 = vld [vmem:[#allocation7 + $0x2c] sm:$0xf]
    %v214 = vld [vmem:[#allocation7 + $0x30] sm:$0xf]
    %v215 = vld [vmem:[#allocation7 + $0x34] sm:$0xf]
    %v216 = vld [vmem:[#allocation7 + $0x38] sm:$0xf]
    %v217 = vld [vmem:[#allocation7 + $0x3c] sm:$0xf]
    %v218 = vld [vmem:[%s4] sm:$0x1]
    %v220 = vlaneseq
    %v221 = vshrl.u32 %v220, 7
    %v222 = vsub.s32 0, %v221
    %v223 = vrot.slane %v218, %v222
    %v241 = vunpack.c.l.b16 %v202
    %v242 = vunpack.c.l.b16 %v203
    %v243 = vunpack.c.l.b16 %v204
    %v244 = vunpack.c.l.b16 %v205
    %v245 = vunpack.c.l.b16 %v206
    %v246 = vunpack.c.l.b16 %v207
    %v247 = vunpack.c.l.b16 %v208
    %v248 = vunpack.c.l.b16 %v209
    %v249 = vunpack.c.l.b16 %v210
    %v250 = vunpack.c.l.b16 %v211
    %v251 = vunpack.c.l.b16 %v212
    %v252 = vunpack.c.l.b16 %v213
    %v253 = vunpack.c.l.b16 %v214
    %v254 = vunpack.c.l.b16 %v215
    %v255 = vunpack.c.l.b16 %v216
    %v256 = vunpack.c.l.b16 %v217
    %v257 = vpack.c.b16 %v242, %v241
    %v258 = vpack.c.b16 %v244, %v243
    %v259 = vpack.c.b16 %v246, %v245
    %v260 = vpack.c.b16 %v248, %v247
    %v261 = vpack.c.b16 %v250, %v249
    %v262 = vpack.c.b16 %v252, %v251
    %v263 = vpack.c.b16 %v254, %v253
    %v264 = vpack.c.b16 %v256, %v255
    %273 = vmatprep.subr.bf16.mxu0 0
    %274 = vmatpush1.bf16.msra.mxu0 %v264
    %275 = vmatprep.subr.bf16.mxu0 0
    %276 = vmatpush1.bf16.msra.mxu0 %v263
    %277 = vmatprep.subr.bf16.mxu0 0
    %278 = vmatpush1.bf16.msra.mxu0 %v262
    %279 = vmatprep.subr.bf16.mxu0 0
    %280 = vmatpush1.bf16.msra.mxu0 %v261
    %281 = vmatprep.subr.bf16.mxu0 0
    %282 = vmatpush1.bf16.msra.mxu0 %v260
    %283 = vmatprep.subr.bf16.mxu0 0
    %284 = vmatpush1.bf16.msra.mxu0 %v259
    %285 = vmatprep.subr.bf16.mxu0 0
    %286 = vmatpush1.bf16.msra.mxu0 %v258
    %287 = vmatprep.subr.bf16.mxu0 0
    %288 = vmatpush1.bf16.msra.mxu0 %v257
    %289 = vmatprep.subr.bf16.mxu0 0
    %290 = vmatpush2.bf16.msra.mxu0 0
    %291 = vmatprep.subr.bf16.mxu0 0
    %292 = vmatpush2.bf16.msra.mxu0 0
    %293 = vmatprep.subr.bf16.mxu0 0
    %294 = vmatpush2.bf16.msra.mxu0 0
    %295 = vmatprep.subr.bf16.mxu0 0
    %296 = vmatpush2.bf16.msra.mxu0 0
    %297 = vmatprep.subr.bf16.mxu0 0
    %298 = vmatpush2.bf16.msra.mxu0 0
    %299 = vmatprep.subr.bf16.mxu0 0
    %300 = vmatpush2.bf16.msra.mxu0 0
    %301 = vmatprep.subr.bf16.mxu0 0
    %302 = vmatpush2.bf16.msra.mxu0 0
    %303 = vmatprep.subr.bf16.mxu0 0
    %304 = vmatpush2.bf16.msra.mxu0 0
    %305 = vmatprep.mubr.bf16.mxu0 0
    %306 = vmatmul.mubr.bf16.gmra.mxu0 %v195
    %v307 = vpop.f32.mrf.mxu0
    %v308 = vadd.f32 %v223, %v307
    %v309 = vpop.f32.mrf.mxu0
    %v310 = vpop.f32.mrf.mxu0
    %v311 = vadd.f32 %v223, %v310
    %v312 = vpop.f32.mrf.mxu0
    %313 = vmatprep.mubr.bf16.mxu0 0
    %314 = vmatmul.mubr.bf16.gmra.mxu0 %v198
    %v315 = vpop.f32.mrf.mxu0
    %v316 = vadd.f32 %v223, %v315
    %v317 = vpop.f32.mrf.mxu0
    %v318 = vpop.f32.mrf.mxu0
    %v319 = vadd.f32 %v223, %v318
    %v320 = vpop.f32.mrf.mxu0
    %321 = vdwg.mxu0
    %v322 = vmax.f32 %v308, 0.0
    %v323 = vmax.f32 %v311, 0.0
    %v324 = vmax.f32 %v316, 0.0
    %v325 = vmax.f32 %v319, 0.0
    %326 = vst [vmem:[#allocation17] sm:$0xff] %v322
    %327 = vst [vmem:[#allocation17 + $0x8] sm:$0xff] %v323
    %328 = vst [vmem:[#allocation20] sm:$0xff] %v324
    %329 = vst [vmem:[#allocation20 + $0x8] sm:$0xff] %v325
    %v330 = vsub.f32 %v322, %v324
    %v331 = vsub.f32 %v323, %v325
    %v332 = vmul.f32 %v330, %v330
    %v333 = vmul.f32 %v331, %v331
    %334 = vadd.xlane.f32.xlu0 %v332
    %v335 = vpop.xlane.xlu0 %334
    %336 = vadd.xlane.f32.xlu0 %v333
    %v337 = vpop.xlane.xlu0 %336
    %v338 = vadd.f32 %v335, %v337
    %v339 = vrot.slane %v338, 4
    %v340 = vadd.f32 %v338, %v339
    %v341 = vrot.slane %v340, 2
    %v342 = vadd.f32 %v340, %v341
    %v343 = vrot.slane %v342, 1
    %v344 = vadd.f32 %v342, %v343
    %v345 = vrcp.pop 2048.0
    %v346 = vmul.f32 %v344, %v345
    %v347 = vpack.c.bf16 %v323, %v322
    %v348 = vpack.c.bf16 %v325, %v324
    %v349 = vld [vmem:[#allocation8] sm:$0xf]
    %v350 = vld [vmem:[#allocation8 + $0x4] sm:$0xf]
    %v351 = vld [vmem:[#allocation8 + $0x8] sm:$0xf]
    %v352 = vld [vmem:[#allocation8 + $0xc] sm:$0xf]
    %v353 = vld [vmem:[#allocation8 + $0x10] sm:$0xf]
    %v354 = vld [vmem:[#allocation8 + $0x14] sm:$0xf]
    %v355 = vld [vmem:[#allocation8 + $0x18] sm:$0xf]
    %v356 = vld [vmem:[#allocation8 + $0x1c] sm:$0xf]
    %v357 = vld [vmem:[#allocation8 + $0x20] sm:$0xf]
    %v358 = vld [vmem:[#allocation8 + $0x24] sm:$0xf]
    %v359 = vld [vmem:[#allocation8 + $0x28] sm:$0xf]
    %v360 = vld [vmem:[#allocation8 + $0x2c] sm:$0xf]
    %v361 = vld [vmem:[#allocation8 + $0x30] sm:$0xf]
    %v362 = vld [vmem:[#allocation8 + $0x34] sm:$0xf]
    %v363 = vld [vmem:[#allocation8 + $0x38] sm:$0xf]
    %v364 = vld [vmem:[#allocation8 + $0x3c] sm:$0xf]
    %v365 = vld [vmem:[%s6] sm:$0x1]
    %v367 = vlaneseq
    %v368 = vshrl.u32 %v367, 7
    %v369 = vsub.s32 0, %v368
    %v370 = vrot.slane %v365, %v369
    %v388 = vunpack.c.l.b16 %v349
    %v389 = vunpack.c.l.b16 %v350
    %v390 = vunpack.c.l.b16 %v351
    %v391 = vunpack.c.l.b16 %v352
    %v392 = vunpack.c.l.b16 %v353
    %v393 = vunpack.c.l.b16 %v354
    %v394 = vunpack.c.l.b16 %v355
    %v395 = vunpack.c.l.b16 %v356
    %v396 = vunpack.c.l.b16 %v357
    %v397 = vunpack.c.l.b16 %v358
    %v398 = vunpack.c.l.b16 %v359
    %v399 = vunpack.c.l.b16 %v360
    %v400 = vunpack.c.l.b16 %v361
    %v401 = vunpack.c.l.b16 %v362
    %v402 = vunpack.c.l.b16 %v363
    %v403 = vunpack.c.l.b16 %v364
    %v404 = vpack.c.b16 %v389, %v388
    %v405 = vpack.c.b16 %v391, %v390
    %v406 = vpack.c.b16 %v393, %v392
    %v407 = vpack.c.b16 %v395, %v394
    %v408 = vpack.c.b16 %v397, %v396
    %v409 = vpack.c.b16 %v399, %v398
    %v410 = vpack.c.b16 %v401, %v400
    %v411 = vpack.c.b16 %v403, %v402
    %420 = vmatprep.subr.bf16.mxu0 0
    %421 = vmatpush1.bf16.msra.mxu0 %v411
    %422 = vmatprep.subr.bf16.mxu0 0
    %423 = vmatpush1.bf16.msra.mxu0 %v410
    %424 = vmatprep.subr.bf16.mxu0 0
    %425 = vmatpush1.bf16.msra.mxu0 %v409
    %426 = vmatprep.subr.bf16.mxu0 0
    %427 = vmatpush1.bf16.msra.mxu0 %v408
    %428 = vmatprep.subr.bf16.mxu0 0
    %429 = vmatpush1.bf16.msra.mxu0 %v407
    %430 = vmatprep.subr.bf16.mxu0 0
    %431 = vmatpush1.bf16.msra.mxu0 %v406
    %432 = vmatprep.subr.bf16.mxu0 0
    %433 = vmatpush1.bf16.msra.mxu0 %v405
    %434 = vmatprep.subr.bf16.mxu0 0
    %435 = vmatpush1.bf16.msra.mxu0 %v404
    %436 = vmatprep.subr.bf16.mxu0 0
    %437 = vmatpush2.bf16.msra.mxu0 0
    %438 = vmatprep.subr.bf16.mxu0 0
    %439 = vmatpush2.bf16.msra.mxu0 0
    %440 = vmatprep.subr.bf16.mxu0 0
    %441 = vmatpush2.bf16.msra.mxu0 0
    %442 = vmatprep.subr.bf16.mxu0 0
    %443 = vmatpush2.bf16.msra.mxu0 0
    %444 = vmatprep.subr.bf16.mxu0 0
    %445 = vmatpush2.bf16.msra.mxu0 0
    %446 = vmatprep.subr.bf16.mxu0 0
    %447 = vmatpush2.bf16.msra.mxu0 0
    %448 = vmatprep.subr.bf16.mxu0 0
    %449 = vmatpush2.bf16.msra.mxu0 0
    %450 = vmatprep.subr.bf16.mxu0 0
    %451 = vmatpush2.bf16.msra.mxu0 0
    %452 = vmatprep.mubr.bf16.mxu0 0
    %453 = vmatmul.mubr.bf16.gmra.mxu0 %v347
    %v454 = vpop.f32.mrf.mxu0
    %v455 = vadd.f32 %v370, %v454
    %v456 = vpop.f32.mrf.mxu0
    %v457 = vpop.f32.mrf.mxu0
    %v458 = vadd.f32 %v370, %v457
    %v459 = vpop.f32.mrf.mxu0
    %460 = vmatprep.mubr.bf16.mxu0 0
    %461 = vmatmul.mubr.bf16.gmra.mxu0 %v348
    %v462 = vpop.f32.mrf.mxu0
    %v463 = vadd.f32 %v370, %v462
    %v464 = vpop.f32.mrf.mxu0
    %v465 = vpop.f32.mrf.mxu0
    %v466 = vadd.f32 %v370, %v465
    %v467 = vpop.f32.mrf.mxu0
    %468 = vdwg.mxu0
    %v469 = vmax.f32 %v455, 0.0
    %v470 = vmax.f32 %v458, 0.0
    %v471 = vmax.f32 %v463, 0.0
    %v472 = vmax.f32 %v466, 0.0
    %473 = vst [vmem:[#allocation18] sm:$0xff] %v469
    %474 = vst [vmem:[#allocation18 + $0x8] sm:$0xff] %v470
    %475 = vst [vmem:[#allocation21] sm:$0xff] %v471
    %476 = vst [vmem:[#allocation21 + $0x8] sm:$0xff] %v472
    %v477 = vsub.f32 %v469, %v471
    %v478 = vsub.f32 %v470, %v472
    %v479 = vmul.f32 %v477, %v477
    %v480 = vmul.f32 %v478, %v478
    %481 = vadd.xlane.f32.xlu0 %v479
    %v482 = vpop.xlane.xlu0 %481
    %483 = vadd.xlane.f32.xlu0 %v480
    %v484 = vpop.xlane.xlu0 %483
    %v485 = vadd.f32 %v482, %v484
    %v486 = vrot.slane %v485, 4
    %v487 = vadd.f32 %v485, %v486
    %v488 = vrot.slane %v487, 2
    %v489 = vadd.f32 %v487, %v488
    %v490 = vrot.slane %v489, 1
    %v491 = vadd.f32 %v489, %v490
    %v492 = vmul.f32 %v491, %v345
    %v493 = vadd.f32 %v346, %v492
    %v494 = vld [vmem:[#allocation10] sm:$0xf]
    %v495 = vld [vmem:[#allocation10 + $0x4] sm:$0xf]
    %v496 = vld [vmem:[#allocation10 + $0x8] sm:$0xf]
    %v497 = vld [vmem:[#allocation10 + $0xc] sm:$0xf]
    %v498 = vld [vmem:[#allocation10 + $0x10] sm:$0xf]
    %v499 = vld [vmem:[#allocation10 + $0x14] sm:$0xf]
    %v500 = vld [vmem:[#allocation10 + $0x18] sm:$0xf]
    %v501 = vld [vmem:[#allocation10 + $0x1c] sm:$0xf]
    %v502 = vld [vmem:[#allocation10 + $0x20] sm:$0xf]
    %v503 = vld [vmem:[#allocation10 + $0x24] sm:$0xf]
    %v504 = vld [vmem:[#allocation10 + $0x28] sm:$0xf]
    %v505 = vld [vmem:[#allocation10 + $0x2c] sm:$0xf]
    %v506 = vld [vmem:[#allocation10 + $0x30] sm:$0xf]
    %v507 = vld [vmem:[#allocation10 + $0x34] sm:$0xf]
    %v508 = vld [vmem:[#allocation10 + $0x38] sm:$0xf]
    %v509 = vld [vmem:[#allocation10 + $0x3c] sm:$0xf]
    %v510 = vld [vmem:[%s8] sm:$0x1]
    %v512 = vlaneseq
    %v513 = vshrl.u32 %v512, 7
    %v514 = vsub.s32 0, %v513
    %v515 = vrot.slane %v510, %v514
    %v533 = vunpack.c.l.b16 %v494
    %v534 = vunpack.c.l.b16 %v495
    %v535 = vunpack.c.l.b16 %v496
    %v536 = vunpack.c.l.b16 %v497
    %v537 = vunpack.c.l.b16 %v498
    %v538 = vunpack.c.l.b16 %v499
    %v539 = vunpack.c.l.b16 %v500
    %v540 = vunpack.c.l.b16 %v501
    %v541 = vunpack.c.l.b16 %v502
    %v542 = vunpack.c.l.b16 %v503
    %v543 = vunpack.c.l.b16 %v504
    %v544 = vunpack.c.l.b16 %v505
    %v545 = vunpack.c.l.b16 %v506
    %v546 = vunpack.c.l.b16 %v507
    %v547 = vunpack.c.l.b16 %v508
    %v548 = vunpack.c.l.b16 %v509
    %v549 = vpack.c.b16 %v534, %v533
    %v550 = vpack.c.b16 %v536, %v535
    %v551 = vpack.c.b16 %v538, %v537
    %v552 = vpack.c.b16 %v540, %v539
    %v553 = vpack.c.b16 %v542, %v541
    %v554 = vpack.c.b16 %v544, %v543
    %v555 = vpack.c.b16 %v546, %v545
    %v556 = vpack.c.b16 %v548, %v547
    %565 = vmatprep.subr.bf16.mxu0 0
    %566 = vmatpush1.bf16.msra.mxu0 %v556
    %567 = vmatprep.subr.bf16.mxu0 0
    %568 = vmatpush1.bf16.msra.mxu0 %v555
    %569 = vmatprep.subr.bf16.mxu0 0
    %570 = vmatpush1.bf16.msra.mxu0 %v554
    %571 = vmatprep.subr.bf16.mxu0 0
    %572 = vmatpush1.bf16.msra.mxu0 %v553
    %573 = vmatprep.subr.bf16.mxu0 0
    %574 = vmatpush1.bf16.msra.mxu0 %v552
    %575 = vmatprep.subr.bf16.mxu0 0
    %576 = vmatpush1.bf16.msra.mxu0 %v551
    %577 = vmatprep.subr.bf16.mxu0 0
    %578 = vmatpush1.bf16.msra.mxu0 %v550
    %579 = vmatprep.subr.bf16.mxu0 0
    %580 = vmatpush1.bf16.msra.mxu0 %v549
    %581 = vmatprep.subr.bf16.mxu0 0
    %582 = vmatpush2.bf16.msra.mxu0 0
    %583 = vmatprep.subr.bf16.mxu0 0
    %584 = vmatpush2.bf16.msra.mxu0 0
    %585 = vmatprep.subr.bf16.mxu0 0
    %586 = vmatpush2.bf16.msra.mxu0 0
    %587 = vmatprep.subr.bf16.mxu0 0
    %588 = vmatpush2.bf16.msra.mxu0 0
    %589 = vmatprep.subr.bf16.mxu0 0
    %590 = vmatpush2.bf16.msra.mxu0 0
    %591 = vmatprep.subr.bf16.mxu0 0
    %592 = vmatpush2.bf16.msra.mxu0 0
    %593 = vmatprep.subr.bf16.mxu0 0
    %594 = vmatpush2.bf16.msra.mxu0 0
    %595 = vmatprep.subr.bf16.mxu0 0
    %596 = vmatpush2.bf16.msra.mxu0 0
    %597 = vmatprep.mubr.bf16.mxu0 0
    %598 = vmatmul.mubr.bf16.gmra.mxu0 %v195
    %v599 = vpop.f32.mrf.mxu0
    %v600 = vadd.f32 %v515, %v599
    %v601 = vpop.f32.mrf.mxu0
    %v602 = vpop.f32.mrf.mxu0
    %v603 = vadd.f32 %v515, %v602
    %v604 = vpop.f32.mrf.mxu0
    %605 = vmatprep.mubr.bf16.mxu0 0
    %606 = vmatmul.mubr.bf16.gmra.mxu0 %v201
    %v607 = vpop.f32.mrf.mxu0
    %v608 = vadd.f32 %v515, %v607
    %v609 = vpop.f32.mrf.mxu0
    %v610 = vpop.f32.mrf.mxu0
    %v611 = vadd.f32 %v515, %v610
    %v612 = vpop.f32.mrf.mxu0
    %613 = vdwg.mxu0
    %v614 = vmax.f32 %v600, 0.0
    %v615 = vmax.f32 %v603, 0.0
    %v616 = vmax.f32 %v608, 0.0
    %v617 = vmax.f32 %v611, 0.0
    %618 = vst [vmem:[#allocation23] sm:$0xff] %v614
    %619 = vst [vmem:[#allocation23 + $0x8] sm:$0xff] %v615
    %620 = vst [vmem:[#allocation26] sm:$0xff] %v616
    %621 = vst [vmem:[#allocation26 + $0x8] sm:$0xff] %v617
    %v622 = vpack.c.bf16 %v615, %v614
    %v623 = vpack.c.bf16 %v617, %v616
    %624 = vmatprep.subr.bf16.mxu0 0
    %625 = vmatpush1.bf16.xpose.msra.mxu0 0
    %626 = vmatprep.subr.bf16.mxu0 0
    %627 = vmatpush1.bf16.xpose.msra.mxu0 0
    %628 = vmatprep.subr.bf16.mxu0 0
    %629 = vmatpush1.bf16.xpose.msra.mxu0 0
    %630 = vmatprep.subr.bf16.mxu0 0
    %631 = vmatpush1.bf16.xpose.msra.mxu0 0
    %632 = vmatprep.subr.bf16.mxu0 0
    %633 = vmatpush1.bf16.xpose.msra.mxu0 0
    %634 = vmatprep.subr.bf16.mxu0 0
    %635 = vmatpush1.bf16.xpose.msra.mxu0 0
    %636 = vmatprep.subr.bf16.mxu0 0
    %637 = vmatpush1.bf16.xpose.msra.mxu0 0
    %638 = vmatprep.subr.bf16.mxu0 0
    %639 = vmatpush1.bf16.xpose.msra.mxu0 %v623
    %640 = vmatprep.subr.bf16.mxu0 0
    %641 = vmatpush2.bf16.xpose.msra.mxu0 0
    %642 = vmatprep.subr.bf16.mxu0 0
    %643 = vmatpush2.bf16.xpose.msra.mxu0 0
    %644 = vmatprep.subr.bf16.mxu0 0
    %645 = vmatpush2.bf16.xpose.msra.mxu0 0
    %646 = vmatprep.subr.bf16.mxu0 0
    %647 = vmatpush2.bf16.xpose.msra.mxu0 0
    %648 = vmatprep.subr.bf16.mxu0 0
    %649 = vmatpush2.bf16.xpose.msra.mxu0 0
    %650 = vmatprep.subr.bf16.mxu0 0
    %651 = vmatpush2.bf16.xpose.msra.mxu0 0
    %652 = vmatprep.subr.bf16.mxu0 0
    %653 = vmatpush2.bf16.xpose.msra.mxu0 0
    %654 = vmatprep.subr.bf16.mxu0 0
    %655 = vmatpush2.bf16.xpose.msra.mxu0 0
    %656 = vmatprep.mubr.bf16.mxu0 0
    %657 = vmatmul.mubr.bf16.gmra.mxu0 %v623
    %v658 = vpop.f32.mrf.mxu0
    %v659 = vadd.f32 0.0, %v658
    %v660 = vpop.f32.mrf.mxu0
    %v661 = vpop.f32.mrf.mxu0
    %v662 = vadd.f32 0.0, %v661
    %v663 = vpop.f32.mrf.mxu0
    %664 = vdwg.mxu0
    %v665 = vmul.f32 %v659, %v345
    %v666 = vmul.f32 %v662, %v345
    %667 = vmatprep.subr.bf16.mxu0 0
    %668 = vmatpush1.bf16.xpose.msra.mxu0 0
    %669 = vmatprep.subr.bf16.mxu0 0
    %670 = vmatpush1.bf16.xpose.msra.mxu0 0
    %671 = vmatprep.subr.bf16.mxu0 0
    %672 = vmatpush1.bf16.xpose.msra.mxu0 0
    %673 = vmatprep.subr.bf16.mxu0 0
    %674 = vmatpush1.bf16.xpose.msra.mxu0 0
    %675 = vmatprep.subr.bf16.mxu0 0
    %676 = vmatpush1.bf16.xpose.msra.mxu0 0
    %677 = vmatprep.subr.bf16.mxu0 0
    %678 = vmatpush1.bf16.xpose.msra.mxu0 0
    %679 = vmatprep.subr.bf16.mxu0 0
    %680 = vmatpush1.bf16.xpose.msra.mxu0 0
    %681 = vmatprep.subr.bf16.mxu0 0
    %682 = vmatpush1.bf16.xpose.msra.mxu0 %v622
    %683 = vmatprep.subr.bf16.mxu0 0
    %684 = vmatpush2.bf16.xpose.msra.mxu0 0
    %685 = vmatprep.subr.bf16.mxu0 0
    %686 = vmatpush2.bf16.xpose.msra.mxu0 0
    %687 = vmatprep.subr.bf16.mxu0 0
    %688 = vmatpush2.bf16.xpose.msra.mxu0 0
    %689 = vmatprep.subr.bf16.mxu0 0
    %690 = vmatpush2.bf16.xpose.msra.mxu0 0
    %691 = vmatprep.subr.bf16.mxu0 0
    %692 = vmatpush2.bf16.xpose.msra.mxu0 0
    %693 = vmatprep.subr.bf16.mxu0 0
    %694 = vmatpush2.bf16.xpose.msra.mxu0 0
    %695 = vmatprep.subr.bf16.mxu0 0
    %696 = vmatpush2.bf16.xpose.msra.mxu0 0
    %697 = vmatprep.subr.bf16.mxu0 0
    %698 = vmatpush2.bf16.xpose.msra.mxu0 0
    %699 = vmatprep.mubr.bf16.mxu0 0
    %700 = vmatmul.mubr.bf16.gmra.mxu0 %v622
    %v701 = vpop.f32.mrf.mxu0
    %v702 = vadd.f32 0.0, %v701
    %v703 = vpop.f32.mrf.mxu0
    %v704 = vpop.f32.mrf.mxu0
    %v705 = vadd.f32 0.0, %v704
    %v706 = vpop.f32.mrf.mxu0
    %707 = vdwg.mxu0
    %v708 = vmul.f32 %v702, %v345
    %v709 = vmul.f32 %v705, %v345
    %v710 = vsub.f32 %v665, %v708
    %v711 = vsub.f32 %v666, %v709
    %v712 = vmul.f32 %v710, %v710
    %v713 = vmul.f32 %v711, %v711
    %vm714 = vcmask 130048
    %v715 = vsel %vm714, %v712, 0.0
    %716 = vadd.xlane.f32.xlu0 %v715
    %v717 = vpop.xlane.xlu0 %716
    %v718 = vsel %vm714, %v713, 0.0
    %719 = vadd.xlane.f32.xlu0 %v718
    %v720 = vpop.xlane.xlu0 %719
    %v721 = vadd.f32 %v717, %v720
    %v722 = vrot.slane %v721, 4
    %v723 = vadd.f32 %v721, %v722
    %v724 = vrot.slane %v723, 2
    %v725 = vadd.f32 %v723, %v724
    %v726 = vrot.slane %v725, 1
    %v727 = vadd.f32 %v725, %v726
    %v728 = vld [vmem:[#allocation11] sm:$0xf]
    %v729 = vld [vmem:[#allocation11 + $0x4] sm:$0xf]
    %v730 = vld [vmem:[#allocation11 + $0x8] sm:$0xf]
    %v731 = vld [vmem:[#allocation11 + $0xc] sm:$0xf]
    %v732 = vld [vmem:[#allocation11 + $0x10] sm:$0xf]
    %v733 = vld [vmem:[#allocation11 + $0x14] sm:$0xf]
    %v734 = vld [vmem:[#allocation11 + $0x18] sm:$0xf]
    %v735 = vld [vmem:[#allocation11 + $0x1c] sm:$0xf]
    %v736 = vld [vmem:[#allocation11 + $0x20] sm:$0xf]
    %v737 = vld [vmem:[#allocation11 + $0x24] sm:$0xf]
    %v738 = vld [vmem:[#allocation11 + $0x28] sm:$0xf]
    %v739 = vld [vmem:[#allocation11 + $0x2c] sm:$0xf]
    %v740 = vld [vmem:[#allocation11 + $0x30] sm:$0xf]
    %v741 = vld [vmem:[#allocation11 + $0x34] sm:$0xf]
    %v742 = vld [vmem:[#allocation11 + $0x38] sm:$0xf]
    %v743 = vld [vmem:[#allocation11 + $0x3c] sm:$0xf]
    %v744 = vld [vmem:[%s10] sm:$0x1]
    %v746 = vlaneseq
    %v747 = vshrl.u32 %v746, 7
    %v748 = vsub.s32 0, %v747
    %v749 = vrot.slane %v744, %v748
    %v767 = vunpack.c.l.b16 %v728
    %v768 = vunpack.c.l.b16 %v729
    %v769 = vunpack.c.l.b16 %v730
    %v770 = vunpack.c.l.b16 %v731
    %v771 = vunpack.c.l.b16 %v732
    %v772 = vunpack.c.l.b16 %v733
    %v773 = vunpack.c.l.b16 %v734
    %v774 = vunpack.c.l.b16 %v735
    %v775 = vunpack.c.l.b16 %v736
    %v776 = vunpack.c.l.b16 %v737
    %v777 = vunpack.c.l.b16 %v738
    %v778 = vunpack.c.l.b16 %v739
    %v779 = vunpack.c.l.b16 %v740
    %v780 = vunpack.c.l.b16 %v741
    %v781 = vunpack.c.l.b16 %v742
    %v782 = vunpack.c.l.b16 %v743
    %v783 = vpack.c.b16 %v768, %v767
    %v784 = vpack.c.b16 %v770, %v769
    %v785 = vpack.c.b16 %v772, %v771
    %v786 = vpack.c.b16 %v774, %v773
    %v787 = vpack.c.b16 %v776, %v775
    %v788 = vpack.c.b16 %v778, %v777
    %v789 = vpack.c.b16 %v780, %v779
    %v790 = vpack.c.b16 %v782, %v781
    %799 = vmatprep.subr.bf16.mxu0 0
    %800 = vmatpush1.bf16.msra.mxu0 %v790
    %801 = vmatprep.subr.bf16.mxu0 0
    %802 = vmatpush1.bf16.msra.mxu0 %v789
    %803 = vmatprep.subr.bf16.mxu0 0
    %804 = vmatpush1.bf16.msra.mxu0 %v788
    %805 = vmatprep.subr.bf16.mxu0 0
    %806 = vmatpush1.bf16.msra.mxu0 %v787
    %807 = vmatprep.subr.bf16.mxu0 0
    %808 = vmatpush1.bf16.msra.mxu0 %v786
    %809 = vmatprep.subr.bf16.mxu0 0
    %810 = vmatpush1.bf16.msra.mxu0 %v785
    %811 = vmatprep.subr.bf16.mxu0 0
    %812 = vmatpush1.bf16.msra.mxu0 %v784
    %813 = vmatprep.subr.bf16.mxu0 0
    %814 = vmatpush1.bf16.msra.mxu0 %v783
    %815 = vmatprep.subr.bf16.mxu0 0
    %816 = vmatpush2.bf16.msra.mxu0 0
    %817 = vmatprep.subr.bf16.mxu0 0
    %818 = vmatpush2.bf16.msra.mxu0 0
    %819 = vmatprep.subr.bf16.mxu0 0
    %820 = vmatpush2.bf16.msra.mxu0 0
    %821 = vmatprep.subr.bf16.mxu0 0
    %822 = vmatpush2.bf16.msra.mxu0 0
    %823 = vmatprep.subr.bf16.mxu0 0
    %824 = vmatpush2.bf16.msra.mxu0 0
    %825 = vmatprep.subr.bf16.mxu0 0
    %826 = vmatpush2.bf16.msra.mxu0 0
    %827 = vmatprep.subr.bf16.mxu0 0
    %828 = vmatpush2.bf16.msra.mxu0 0
    %829 = vmatprep.subr.bf16.mxu0 0
    %830 = vmatpush2.bf16.msra.mxu0 0
    %831 = vmatprep.mubr.bf16.mxu0 0
    %832 = vmatmul.mubr.bf16.gmra.mxu0 %v622
    %v833 = vpop.f32.mrf.mxu0
    %v834 = vadd.f32 %v749, %v833
    %v835 = vpop.f32.mrf.mxu0
    %v836 = vpop.f32.mrf.mxu0
    %v837 = vadd.f32 %v749, %v836
    %v838 = vpop.f32.mrf.mxu0
    %839 = vmatprep.mubr.bf16.mxu0 0
    %840 = vmatmul.mubr.bf16.gmra.mxu0 %v623
    %v841 = vpop.f32.mrf.mxu0
    %v842 = vadd.f32 %v749, %v841
    %v843 = vpop.f32.mrf.mxu0
    %v844 = vpop.f32.mrf.mxu0
    %v845 = vadd.f32 %v749, %v844
    %v846 = vpop.f32.mrf.mxu0
    %847 = vdwg.mxu0
    %v848 = vmax.f32 %v834, 0.0
    %v849 = vmax.f32 %v837, 0.0
    %v850 = vmax.f32 %v842, 0.0
    %v851 = vmax.f32 %v845, 0.0
    %852 = vst [vmem:[#allocation24] sm:$0xff] %v848
    %853 = vst [vmem:[#allocation24 + $0x8] sm:$0xff] %v849
    %854 = vst [vmem:[#allocation27] sm:$0xff] %v850
    %855 = vst [vmem:[#allocation27 + $0x8] sm:$0xff] %v851
    %v856 = vpack.c.bf16 %v849, %v848
    %v857 = vpack.c.bf16 %v851, %v850
    %858 = vmatprep.subr.bf16.mxu0 0
    %859 = vmatpush1.bf16.xpose.msra.mxu0 0
    %860 = vmatprep.subr.bf16.mxu0 0
    %861 = vmatpush1.bf16.xpose.msra.mxu0 0
    %862 = vmatprep.subr.bf16.mxu0 0
    %863 = vmatpush1.bf16.xpose.msra.mxu0 0
    %864 = vmatprep.subr.bf16.mxu0 0
    %865 = vmatpush1.bf16.xpose.msra.mxu0 0
    %866 = vmatprep.subr.bf16.mxu0 0
    %867 = vmatpush1.bf16.xpose.msra.mxu0 0
    %868 = vmatprep.subr.bf16.mxu0 0
    %869 = vmatpush1.bf16.xpose.msra.mxu0 0
    %870 = vmatprep.subr.bf16.mxu0 0
    %871 = vmatpush1.bf16.xpose.msra.mxu0 0
    %872 = vmatprep.subr.bf16.mxu0 0
    %873 = vmatpush1.bf16.xpose.msra.mxu0 %v857
    %874 = vmatprep.subr.bf16.mxu0 0
    %875 = vmatpush2.bf16.xpose.msra.mxu0 0
    %876 = vmatprep.subr.bf16.mxu0 0
    %877 = vmatpush2.bf16.xpose.msra.mxu0 0
    %878 = vmatprep.subr.bf16.mxu0 0
    %879 = vmatpush2.bf16.xpose.msra.mxu0 0
    %880 = vmatprep.subr.bf16.mxu0 0
    %881 = vmatpush2.bf16.xpose.msra.mxu0 0
    %882 = vmatprep.subr.bf16.mxu0 0
    %883 = vmatpush2.bf16.xpose.msra.mxu0 0
    %884 = vmatprep.subr.bf16.mxu0 0
    %885 = vmatpush2.bf16.xpose.msra.mxu0 0
    %886 = vmatprep.subr.bf16.mxu0 0
    %887 = vmatpush2.bf16.xpose.msra.mxu0 0
    %888 = vmatprep.subr.bf16.mxu0 0
    %889 = vmatpush2.bf16.xpose.msra.mxu0 0
    %890 = vmatprep.mubr.bf16.mxu0 0
    %891 = vmatmul.mubr.bf16.gmra.mxu0 %v857
    %v892 = vpop.f32.mrf.mxu0
    %v893 = vadd.f32 0.0, %v892
    %v894 = vpop.f32.mrf.mxu0
    %v895 = vpop.f32.mrf.mxu0
    %v896 = vadd.f32 0.0, %v895
    %v897 = vpop.f32.mrf.mxu0
    %898 = vdwg.mxu0
    %v899 = vmul.f32 %v893, %v345
    %v900 = vmul.f32 %v896, %v345
    %901 = vmatprep.subr.bf16.mxu0 0
    %902 = vmatpush1.bf16.xpose.msra.mxu0 0
    %903 = vmatprep.subr.bf16.mxu0 0
    %904 = vmatpush1.bf16.xpose.msra.mxu0 0
    %905 = vmatprep.subr.bf16.mxu0 0
    %906 = vmatpush1.bf16.xpose.msra.mxu0 0
    %907 = vmatprep.subr.bf16.mxu0 0
    %908 = vmatpush1.bf16.xpose.msra.mxu0 0
    %909 = vmatprep.subr.bf16.mxu0 0
    %910 = vmatpush1.bf16.xpose.msra.mxu0 0
    %911 = vmatprep.subr.bf16.mxu0 0
    %912 = vmatpush1.bf16.xpose.msra.mxu0 0
    %913 = vmatprep.subr.bf16.mxu0 0
    %914 = vmatpush1.bf16.xpose.msra.mxu0 0
    %915 = vmatprep.subr.bf16.mxu0 0
    %916 = vmatpush1.bf16.xpose.msra.mxu0 %v856
    %917 = vmatprep.subr.bf16.mxu0 0
    %918 = vmatpush2.bf16.xpose.msra.mxu0 0
    %919 = vmatprep.subr.bf16.mxu0 0
    %920 = vmatpush2.bf16.xpose.msra.mxu0 0
    %921 = vmatprep.subr.bf16.mxu0 0
    %922 = vmatpush2.bf16.xpose.msra.mxu0 0
    %923 = vmatprep.subr.bf16.mxu0 0
    %924 = vmatpush2.bf16.xpose.msra.mxu0 0
    %925 = vmatprep.subr.bf16.mxu0 0
    %926 = vmatpush2.bf16.xpose.msra.mxu0 0
    %927 = vmatprep.subr.bf16.mxu0 0
    %928 = vmatpush2.bf16.xpose.msra.mxu0 0
    %929 = vmatprep.subr.bf16.mxu0 0
    %930 = vmatpush2.bf16.xpose.msra.mxu0 0
    %931 = vmatprep.subr.bf16.mxu0 0
    %932 = vmatpush2.bf16.xpose.msra.mxu0 0
    %933 = vmatprep.mubr.bf16.mxu0 0
    %934 = vmatmul.mubr.bf16.gmra.mxu0 %v856
    %v935 = vpop.f32.mrf.mxu0
    %v936 = vadd.f32 0.0, %v935
    %v937 = vpop.f32.mrf.mxu0
    %v938 = vpop.f32.mrf.mxu0
    %v939 = vadd.f32 0.0, %v938
    %v940 = vpop.f32.mrf.mxu0
    %941 = vdwg.mxu0
    %v942 = vmul.f32 %v936, %v345
    %v943 = vmul.f32 %v939, %v345
    %v944 = vsub.f32 %v899, %v942
    %v945 = vsub.f32 %v900, %v943
    %v946 = vmul.f32 %v944, %v944
    %v947 = vmul.f32 %v945, %v945
    %v948 = vsel %vm714, %v946, 0.0
    %949 = vadd.xlane.f32.xlu0 %v948
    %v950 = vpop.xlane.xlu0 %949
    %v951 = vsel %vm714, %v947, 0.0
    %952 = vadd.xlane.f32.xlu0 %v951
    %v953 = vpop.xlane.xlu0 %952
    %v954 = vadd.f32 %v950, %v953
    %v955 = vrot.slane %v954, 4
    %v956 = vadd.f32 %v954, %v955
    %v957 = vrot.slane %v956, 2
    %v958 = vadd.f32 %v956, %v957
    %v959 = vrot.slane %v958, 1
    %v960 = vadd.f32 %v958, %v959
    %v961 = vadd.f32 %v727, %v960
    %v962 = vpack.c.bf16 %v470, %v469
    %v963 = vpack.c.bf16 %v472, %v471
    %v964 = vld [vmem:[#allocation13] sm:$0xf]
    %v965 = vld [vmem:[#allocation13 + $0x4] sm:$0xf]
    %v966 = vld [vmem:[#allocation13 + $0x8] sm:$0xf]
    %v967 = vld [vmem:[#allocation13 + $0xc] sm:$0xf]
    %v968 = vld [vmem:[#allocation13 + $0x10] sm:$0xf]
    %v969 = vld [vmem:[#allocation13 + $0x14] sm:$0xf]
    %v970 = vld [vmem:[#allocation13 + $0x18] sm:$0xf]
    %v971 = vld [vmem:[#allocation13 + $0x1c] sm:$0xf]
    %v972 = vld [vmem:[#allocation13 + $0x20] sm:$0xf]
    %v973 = vld [vmem:[#allocation13 + $0x24] sm:$0xf]
    %v974 = vld [vmem:[#allocation13 + $0x28] sm:$0xf]
    %v975 = vld [vmem:[#allocation13 + $0x2c] sm:$0xf]
    %v976 = vld [vmem:[#allocation13 + $0x30] sm:$0xf]
    %v977 = vld [vmem:[#allocation13 + $0x34] sm:$0xf]
    %v978 = vld [vmem:[#allocation13 + $0x38] sm:$0xf]
    %v979 = vld [vmem:[#allocation13 + $0x3c] sm:$0xf]
    %v980 = vld [vmem:[#allocation14] sm:$0xf]
    %v981 = vld [vmem:[#allocation14 + $0x4] sm:$0xf]
    %v982 = vld [vmem:[#allocation14 + $0x8] sm:$0xf]
    %v983 = vld [vmem:[#allocation14 + $0xc] sm:$0xf]
    %v984 = vld [vmem:[#allocation14 + $0x10] sm:$0xf]
    %v985 = vld [vmem:[#allocation14 + $0x14] sm:$0xf]
    %v986 = vld [vmem:[#allocation14 + $0x18] sm:$0xf]
    %v987 = vld [vmem:[#allocation14 + $0x1c] sm:$0xf]
    %v988 = vld [vmem:[#allocation14 + $0x20] sm:$0xf]
    %v989 = vld [vmem:[#allocation14 + $0x24] sm:$0xf]
    %v990 = vld [vmem:[#allocation14 + $0x28] sm:$0xf]
    %v991 = vld [vmem:[#allocation14 + $0x2c] sm:$0xf]
    %v992 = vld [vmem:[#allocation14 + $0x30] sm:$0xf]
    %v993 = vld [vmem:[#allocation14 + $0x34] sm:$0xf]
    %v994 = vld [vmem:[#allocation14 + $0x38] sm:$0xf]
    %v995 = vld [vmem:[#allocation14 + $0x3c] sm:$0xf]
    %v1012 = vunpack.c.l.b16 %v980
    %v1013 = vunpack.c.l.b16 %v981
    %v1014 = vunpack.c.l.b16 %v982
    %v1015 = vunpack.c.l.b16 %v983
    %v1016 = vunpack.c.l.b16 %v984
    %v1017 = vunpack.c.l.b16 %v985
    %v1018 = vunpack.c.l.b16 %v986
    %v1019 = vunpack.c.l.b16 %v987
    %v1020 = vunpack.c.l.b16 %v988
    %v1021 = vunpack.c.l.b16 %v989
    %v1022 = vunpack.c.l.b16 %v990
    %v1023 = vunpack.c.l.b16 %v991
    %v1024 = vunpack.c.l.b16 %v992
    %v1025 = vunpack.c.l.b16 %v993
    %v1026 = vunpack.c.l.b16 %v994
    %v1027 = vunpack.c.l.b16 %v995
    %v1028 = vpack.c.b16 %v1013, %v1012
    %v1029 = vpack.c.b16 %v1015, %v1014
    %v1030 = vpack.c.b16 %v1017, %v1016
    %v1031 = vpack.c.b16 %v1019, %v1018
    %v1032 = vpack.c.b16 %v1021, %v1020
    %v1033 = vpack.c.b16 %v1023, %v1022
    %v1034 = vpack.c.b16 %v1025, %v1024
    %v1035 = vpack.c.b16 %v1027, %v1026
    %1044 = vmatprep.subr.bf16.mxu0 0
    %1045 = vmatpush1.bf16.msra.mxu0 %v1035
    %1046 = vmatprep.subr.bf16.mxu0 0
    %1047 = vmatpush1.bf16.msra.mxu0 %v1034
    %1048 = vmatprep.subr.bf16.mxu0 0
    %1049 = vmatpush1.bf16.msra.mxu0 %v1033
    %1050 = vmatprep.subr.bf16.mxu0 0
    %1051 = vmatpush1.bf16.msra.mxu0 %v1032
    %1052 = vmatprep.subr.bf16.mxu0 0
    %1053 = vmatpush1.bf16.msra.mxu0 %v1031
    %1054 = vmatprep.subr.bf16.mxu0 0
    %1055 = vmatpush1.bf16.msra.mxu0 %v1030
    %1056 = vmatprep.subr.bf16.mxu0 0
    %1057 = vmatpush1.bf16.msra.mxu0 %v1029
    %1058 = vmatprep.subr.bf16.mxu0 0
    %1059 = vmatpush1.bf16.msra.mxu0 %v1028
    %1060 = vmatprep.subr.bf16.mxu0 0
    %1061 = vmatpush2.bf16.msra.mxu0 0
    %1062 = vmatprep.subr.bf16.mxu0 0
    %1063 = vmatpush2.bf16.msra.mxu0 0
    %1064 = vmatprep.subr.bf16.mxu0 0
    %1065 = vmatpush2.bf16.msra.mxu0 0
    %1066 = vmatprep.subr.bf16.mxu0 0
    %1067 = vmatpush2.bf16.msra.mxu0 0
    %1068 = vmatprep.subr.bf16.mxu0 0
    %1069 = vmatpush2.bf16.msra.mxu0 0
    %1070 = vmatprep.subr.bf16.mxu0 0
    %1071 = vmatpush2.bf16.msra.mxu0 0
    %1072 = vmatprep.subr.bf16.mxu0 0
    %1073 = vmatpush2.bf16.msra.mxu0 0
    %1074 = vmatprep.subr.bf16.mxu0 0
    %1075 = vmatpush2.bf16.msra.mxu0 0
    %1076 = vmatprep.mubr.bf16.mxu0 0
    %1077 = vmatmul.mubr.bf16.gmra.mxu0 %v856
    %v1078 = vpop.f32.mrf.mxu0
    %v1079 = vadd.f32 0.0, %v1078
    %v1080 = vpop.f32.mrf.mxu0
    %v1081 = vpop.f32.mrf.mxu0
    %v1082 = vadd.f32 0.0, %v1081
    %v1083 = vpop.f32.mrf.mxu0
    %1084 = vmatprep.mubr.bf16.mxu0 0
    %1085 = vmatmul.mubr.bf16.gmra.mxu0 %v857
    %v1086 = vpop.f32.mrf.mxu0
    %v1087 = vadd.f32 0.0, %v1086
    %v1088 = vpop.f32.mrf.mxu0
    %v1089 = vpop.f32.mrf.mxu0
    %v1090 = vadd.f32 0.0, %v1089
    %v1091 = vpop.f32.mrf.mxu0
    %1092 = vdwg.mxu0
    %v1109 = vunpack.c.l.b16 %v964
    %v1110 = vunpack.c.l.b16 %v965
    %v1111 = vunpack.c.l.b16 %v966
    %v1112 = vunpack.c.l.b16 %v967
    %v1113 = vunpack.c.l.b16 %v968
    %v1114 = vunpack.c.l.b16 %v969
    %v1115 = vunpack.c.l.b16 %v970
    %v1116 = vunpack.c.l.b16 %v971
    %v1117 = vunpack.c.l.b16 %v972
    %v1118 = vunpack.c.l.b16 %v973
    %v1119 = vunpack.c.l.b16 %v974
    %v1120 = vunpack.c.l.b16 %v975
    %v1121 = vunpack.c.l.b16 %v976
    %v1122 = vunpack.c.l.b16 %v977
    %v1123 = vunpack.c.l.b16 %v978
    %v1124 = vunpack.c.l.b16 %v979
    %v1125 = vpack.c.b16 %v1110, %v1109
    %v1126 = vpack.c.b16 %v1112, %v1111
    %v1127 = vpack.c.b16 %v1114, %v1113
    %v1128 = vpack.c.b16 %v1116, %v1115
    %v1129 = vpack.c.b16 %v1118, %v1117
    %v1130 = vpack.c.b16 %v1120, %v1119
    %v1131 = vpack.c.b16 %v1122, %v1121
    %v1132 = vpack.c.b16 %v1124, %v1123
    %1141 = vmatprep.subr.bf16.mxu0 0
    %1142 = vmatpush1.bf16.msra.mxu0 %v1132
    %1143 = vmatprep.subr.bf16.mxu0 0
    %1144 = vmatpush1.bf16.msra.mxu0 %v1131
    %1145 = vmatprep.subr.bf16.mxu0 0
    %1146 = vmatpush1.bf16.msra.mxu0 %v1130
    %1147 = vmatprep.subr.bf16.mxu0 0
    %1148 = vmatpush1.bf16.msra.mxu0 %v1129
    %1149 = vmatprep.subr.bf16.mxu0 0
    %1150 = vmatpush1.bf16.msra.mxu0 %v1128
    %1151 = vmatprep.subr.bf16.mxu0 0
    %1152 = vmatpush1.bf16.msra.mxu0 %v1127
    %1153 = vmatprep.subr.bf16.mxu0 0
    %1154 = vmatpush1.bf16.msra.mxu0 %v1126
    %1155 = vmatprep.subr.bf16.mxu0 0
    %1156 = vmatpush1.bf16.msra.mxu0 %v1125
    %1157 = vmatprep.subr.bf16.mxu0 0
    %1158 = vmatpush2.bf16.msra.mxu0 0
    %1159 = vmatprep.subr.bf16.mxu0 0
    %1160 = vmatpush2.bf16.msra.mxu0 0
    %1161 = vmatprep.subr.bf16.mxu0 0
    %1162 = vmatpush2.bf16.msra.mxu0 0
    %1163 = vmatprep.subr.bf16.mxu0 0
    %1164 = vmatpush2.bf16.msra.mxu0 0
    %1165 = vmatprep.subr.bf16.mxu0 0
    %1166 = vmatpush2.bf16.msra.mxu0 0
    %1167 = vmatprep.subr.bf16.mxu0 0
    %1168 = vmatpush2.bf16.msra.mxu0 0
    %1169 = vmatprep.subr.bf16.mxu0 0
    %1170 = vmatpush2.bf16.msra.mxu0 0
    %1171 = vmatprep.subr.bf16.mxu0 0
    %1172 = vmatpush2.bf16.msra.mxu0 0
    %1173 = vmatprep.mubr.bf16.mxu0 0
    %1174 = vmatmul.mubr.bf16.gmra.mxu0 %v962
    %v1175 = vpop.f32.mrf.mxu0
    %v1176 = vadd.f32 %v1079, %v1175
    %v1177 = vpop.f32.mrf.mxu0
    %v1178 = vpop.f32.mrf.mxu0
    %v1179 = vadd.f32 %v1082, %v1178
    %v1180 = vpop.f32.mrf.mxu0
    %1181 = vmatprep.mubr.bf16.mxu0 0
    %1182 = vmatmul.mubr.bf16.gmra.mxu0 %v963
    %v1183 = vpop.f32.mrf.mxu0
    %v1184 = vadd.f32 %v1087, %v1183
    %v1185 = vpop.f32.mrf.mxu0
    %v1186 = vpop.f32.mrf.mxu0
    %v1187 = vadd.f32 %v1090, %v1186
    %v1188 = vpop.f32.mrf.mxu0
    %1189 = vdwg.mxu0
    %v1190 = vld [vmem:[%s13] sm:$0x1]
    %v1192 = vlaneseq
    %v1193 = vshrl.u32 %v1192, 7
    %v1194 = vsub.s32 0, %v1193
    %v1195 = vrot.slane %v1190, %v1194
    %v1197 = vadd.f32 %v1176, %v1195
    %v1198 = vadd.f32 %v1179, %v1195
    %v1199 = vadd.f32 %v1184, %v1195
    %v1200 = vadd.f32 %v1187, %v1195
    %v1201 = vmax.f32 %v1197, 0.0
    %v1202 = vmax.f32 %v1198, 0.0
    %v1203 = vmax.f32 %v1199, 0.0
    %v1204 = vmax.f32 %v1200, 0.0
    %v1205 = vpack.c.bf16 %v1202, %v1201
    %v1206 = vpack.c.bf16 %v1204, %v1203
    %v1207 = vld [vmem:[#allocation16] sm:$0xf]
    %v1208 = vld [vmem:[#allocation16 + $0x4] sm:$0xf]
    %v1209 = vld [vmem:[#allocation16 + $0x8] sm:$0xf]
    %v1210 = vld [vmem:[#allocation16 + $0xc] sm:$0xf]
    %v1211 = vld [vmem:[#allocation16 + $0x10] sm:$0xf]
    %v1212 = vld [vmem:[#allocation16 + $0x14] sm:$0xf]
    %v1213 = vld [vmem:[#allocation16 + $0x18] sm:$0xf]
    %v1214 = vld [vmem:[#allocation16 + $0x1c] sm:$0xf]
    %v1215 = vld [vmem:[#allocation16 + $0x20] sm:$0xf]
    %v1216 = vld [vmem:[#allocation16 + $0x24] sm:$0xf]
    %v1217 = vld [vmem:[#allocation16 + $0x28] sm:$0xf]
    %v1218 = vld [vmem:[#allocation16 + $0x2c] sm:$0xf]
    %v1219 = vld [vmem:[#allocation16 + $0x30] sm:$0xf]
    %v1220 = vld [vmem:[#allocation16 + $0x34] sm:$0xf]
    %v1221 = vld [vmem:[#allocation16 + $0x38] sm:$0xf]
    %v1222 = vld [vmem:[#allocation16 + $0x3c] sm:$0xf]
    %v1223 = vld [vmem:[%s15] sm:$0x1]
    %v1225 = vlaneseq
    %v1226 = vshrl.u32 %v1225, 7
    %v1227 = vsub.s32 0, %v1226
    %v1228 = vrot.slane %v1223, %v1227
    %v1246 = vunpack.c.l.b16 %v1207
    %v1247 = vunpack.c.l.b16 %v1208
    %v1248 = vunpack.c.l.b16 %v1209
    %v1249 = vunpack.c.l.b16 %v1210
    %v1250 = vunpack.c.l.b16 %v1211
    %v1251 = vunpack.c.l.b16 %v1212
    %v1252 = vunpack.c.l.b16 %v1213
    %v1253 = vunpack.c.l.b16 %v1214
    %v1254 = vunpack.c.l.b16 %v1215
    %v1255 = vunpack.c.l.b16 %v1216
    %v1256 = vunpack.c.l.b16 %v1217
    %v1257 = vunpack.c.l.b16 %v1218
    %v1258 = vunpack.c.l.b16 %v1219
    %v1259 = vunpack.c.l.b16 %v1220
    %v1260 = vunpack.c.l.b16 %v1221
    %v1261 = vunpack.c.l.b16 %v1222
    %v1262 = vpack.c.b16 %v1247, %v1246
    %v1263 = vpack.c.b16 %v1249, %v1248
    %v1264 = vpack.c.b16 %v1251, %v1250
    %v1265 = vpack.c.b16 %v1253, %v1252
    %v1266 = vpack.c.b16 %v1255, %v1254
    %v1267 = vpack.c.b16 %v1257, %v1256
    %v1268 = vpack.c.b16 %v1259, %v1258
    %v1269 = vpack.c.b16 %v1261, %v1260
    %1278 = vmatprep.subr.bf16.mxu0 0
    %1279 = vmatpush1.bf16.msra.mxu0 %v1269
    %1280 = vmatprep.subr.bf16.mxu0 0
    %1281 = vmatpush1.bf16.msra.mxu0 %v1268
    %1282 = vmatprep.subr.bf16.mxu0 0
    %1283 = vmatpush1.bf16.msra.mxu0 %v1267
    %1284 = vmatprep.subr.bf16.mxu0 0
    %1285 = vmatpush1.bf16.msra.mxu0 %v1266
    %1286 = vmatprep.subr.bf16.mxu0 0
    %1287 = vmatpush1.bf16.msra.mxu0 %v1265
    %1288 = vmatprep.subr.bf16.mxu0 0
    %1289 = vmatpush1.bf16.msra.mxu0 %v1264
    %1290 = vmatprep.subr.bf16.mxu0 0
    %1291 = vmatpush1.bf16.msra.mxu0 %v1263
    %1292 = vmatprep.subr.bf16.mxu0 0
    %1293 = vmatpush1.bf16.msra.mxu0 %v1262
    %1294 = vmatprep.subr.bf16.mxu0 0
    %1295 = vmatpush2.bf16.msra.mxu0 0
    %1296 = vmatprep.subr.bf16.mxu0 0
    %1297 = vmatpush2.bf16.msra.mxu0 0
    %1298 = vmatprep.subr.bf16.mxu0 0
    %1299 = vmatpush2.bf16.msra.mxu0 0
    %1300 = vmatprep.subr.bf16.mxu0 0
    %1301 = vmatpush2.bf16.msra.mxu0 0
    %1302 = vmatprep.subr.bf16.mxu0 0
    %1303 = vmatpush2.bf16.msra.mxu0 0
    %1304 = vmatprep.subr.bf16.mxu0 0
    %1305 = vmatpush2.bf16.msra.mxu0 0
    %1306 = vmatprep.subr.bf16.mxu0 0
    %1307 = vmatpush2.bf16.msra.mxu0 0
    %1308 = vmatprep.subr.bf16.mxu0 0
    %1309 = vmatpush2.bf16.msra.mxu0 0
    %1310 = vmatprep.mubr.bf16.mxu0 0
    %1311 = vmatmul.mubr.bf16.gmra.mxu0 %v1205
    %v1312 = vpop.f32.mrf.mxu0
    %v1313 = vadd.f32 %v1228, %v1312
    %v1314 = vpop.f32.mrf.mxu0
    %v1315 = vpop.f32.mrf.mxu0
    %v1316 = vadd.f32 %v1228, %v1315
    %v1317 = vpop.f32.mrf.mxu0
    %1318 = vmatprep.mubr.bf16.mxu0 0
    %1319 = vmatmul.mubr.bf16.gmra.mxu0 %v1206
    %v1320 = vpop.f32.mrf.mxu0
    %v1321 = vadd.f32 %v1228, %v1320
    %v1322 = vpop.f32.mrf.mxu0
    %v1323 = vpop.f32.mrf.mxu0
    %v1324 = vadd.f32 %v1228, %v1323
    %v1325 = vpop.f32.mrf.mxu0
    %1326 = vdwg.mxu0
    %1327 = vst [vmem:[#allocation29] sm:$0xff] %v1313
    %1328 = vst [vmem:[#allocation29 + $0x8] sm:$0xff] %v1316
    %1329 = vst [vmem:[#allocation30] sm:$0xff] %v1321
    %1330 = vst [vmem:[#allocation30 + $0x8] sm:$0xff] %v1324
    %v1331 = vmul.f32 %v1313, %v1321
    %v1332 = vmul.f32 %v1316, %v1324
    %1333 = vadd.xlane.f32.xlu0 %v1331
    %v1334 = vpop.xlane.xlu0 %1333
    %1335 = vadd.xlane.f32.xlu0 %v1332
    %v1336 = vpop.xlane.xlu0 %1335
    %v1337 = vmul.f32 %v1313, %v1313
    %v1338 = vmul.f32 %v1316, %v1316
    %1339 = vadd.xlane.f32.xlu0 %v1337
    %v1340 = vpop.xlane.xlu0 %1339
    %1341 = vadd.xlane.f32.xlu0 %v1338
    %v1342 = vpop.xlane.xlu0 %1341
    %v1343 = vmul.f32 %v1321, %v1321
    %v1344 = vmul.f32 %v1324, %v1324
    %1345 = vadd.xlane.f32.xlu0 %v1343
    %v1346 = vpop.xlane.xlu0 %1345
    %1347 = vadd.xlane.f32.xlu0 %v1344
    %v1348 = vpop.xlane.xlu0 %1347
    %v1349 = vmax.f32 %v1340, 1e-16
    %v1350 = vmax.f32 %v1342, 1e-16
    %v1351 = vrsqrt.pop %v1349
    %v1352 = vrsqrt.pop %v1350
    %v1353 = vmul.f32 %v1334, %v1351
    %v1354 = vmul.f32 %v1336, %v1352
    %v1355 = vmax.f32 %v1346, 1e-16
    %v1356 = vmax.f32 %v1348, 1e-16
    %v1357 = vrsqrt.pop %v1355
    %v1358 = vrsqrt.pop %v1356
    %v1359 = vmul.f32 %v1353, %v1357
    %v1360 = vmul.f32 %v1354, %v1358
    %v1361 = vadd.f32 %v1359, %v1360
    %v1362 = vrot.slane %v1361, 4
    %v1363 = vadd.f32 %v1361, %v1362
    %v1364 = vrot.slane %v1363, 2
    %v1365 = vadd.f32 %v1363, %v1364
    %v1366 = vrot.slane %v1365, 1
    %v1367 = vadd.f32 %v1365, %v1366
    %v1368 = vrcp.pop 16.0
    %v1369 = vmul.f32 %v1367, %v1368
    %v1370 = vsub.f32 1.0, %v1369
    %v1371 = vmul.f32 %v1313, %v193
    %v1372 = vmul.f32 %v1316, %v194
    %1373 = vadd.xlane.f32.xlu0 %v1371
    %v1374 = vpop.xlane.xlu0 %1373
    %1375 = vadd.xlane.f32.xlu0 %v1372
    %v1376 = vpop.xlane.xlu0 %1375
    %v1377 = vmul.f32 %v193, %v193
    %v1378 = vmul.f32 %v194, %v194
    %1379 = vadd.xlane.f32.xlu0 %v1377
    %v1380 = vpop.xlane.xlu0 %1379
    %1381 = vadd.xlane.f32.xlu0 %v1378
    %v1382 = vpop.xlane.xlu0 %1381
    %v1383 = vmul.f32 %v1374, %v1351
    %v1384 = vmul.f32 %v1376, %v1352
    %v1385 = vmax.f32 %v1380, 1e-16
    %v1386 = vmax.f32 %v1382, 1e-16
    %v1387 = vrsqrt.pop %v1385
    %v1388 = vrsqrt.pop %v1386
    %v1389 = vmul.f32 %v1383, %v1387
    %v1390 = vmul.f32 %v1384, %v1388
    %v1391 = vadd.f32 %v1389, %v1390
    %v1392 = vrot.slane %v1391, 4
    %v1393 = vadd.f32 %v1391, %v1392
    %v1394 = vrot.slane %v1393, 2
    %v1395 = vadd.f32 %v1393, %v1394
    %v1396 = vrot.slane %v1395, 1
    %v1397 = vadd.f32 %v1395, %v1396
    %v1398 = vmul.f32 %v1397, %v1368
    %v1399 = vsub.f32 1.0, %v1398
    %v1400 = vadd.f32 %v1370, %v1399
    %v1401 = vlaneseq
    %v1402 = vand.u32 %v1401, 127
    %vm1403 = vcmp.eq.s32.totalorder %v1402, 0
    %v1404 = vsel %vm1403, %v1400, 0.0
    %vm1405 = vcmp.eq.s32.totalorder %v1402, 1
    %v1406 = vsel %vm1405, %v493, 0.0
    %v1407 = vadd.f32 %v1404, %v1406
    %vm1408 = vcmp.eq.s32.totalorder %v1402, 2
    %v1409 = vsel %vm1408, %v961, 0.0
    %v1410 = vadd.f32 %v1407, %v1409
    %vm1411 = vcmp.eq.s32.totalorder %v1402, 3
    %v1412 = vsel %vm1411, %v1400, 0.0
    %v1413 = vadd.f32 %v1410, %v1412
    %1414 = vst [vmem:[%s26] sm:$0x1] %v1413
    // Predicated region
    $region102: #{_gimvi_step_impl.1} parent=1 // pred_check
      _
    $region103: #{_gimvi_step_impl.1} parent=1 // pred_check_branch
      %1416 = sbr.rel (0) target = $region105
    $region104: #{_gimvi_step_impl.1} parent=1 // pred_region
      %s1418 = ssub.s32 256, 256
      %1419 = vsyncadd [#allocation4], %s1418
      %s1420 = sshll.u32 [#allocation17], 4
      %s1421 = int_to_ptr.vmem [resolvable:$true] %s1420
      %1426 = dma.vmem_to_hbm [thread:$0]  %s1421, 256, %s16, [#allocation4], 128, 128, 8
    $region105: #{_gimvi_step_impl.1} parent=1 // pred_fallthru
      _
    // Predicated region
    $region106: #{_gimvi_step_impl.1} parent=1 // pred_check
      _
    $region107: #{_gimvi_step_impl.1} parent=1 // pred_check_branch
      %1428 = sbr.rel (0) target = $region109
    $region108: #{_gimvi_step_impl.1} parent=1 // pred_region
      %s1430 = ssub.s32 256, 256
      %1431 = vsyncadd [#allocation19], %s1430
      %s1432 = sshll.u32 [#allocation18], 4
      %s1433 = int_to_ptr.vmem [resolvable:$true] %s1432
      %1438 = dma.vmem_to_hbm [thread:$0]  %s1433, 256, %s17, [#allocation19], 128, 128, 8
    $region109: #{_gimvi_step_impl.1} parent=1 // pred_fallthru
      _
    // Predicated region
    $region110: #{_gimvi_step_impl.1} parent=1 // pred_check
      _
    $region111: #{_gimvi_step_impl.1} parent=1 // pred_check_branch
      %1440 = sbr.rel (0) target = $region113
    $region112: #{_gimvi_step_impl.1} parent=1 // pred_region
      %s1442 = ssub.s32 256, 256
      %1443 = vsyncadd [#allocation19], %s1442
      %s1444 = sshll.u32 [#allocation20], 4
      %s1445 = int_to_ptr.vmem [resolvable:$true] %s1444
      %1450 = dma.vmem_to_hbm [thread:$0]  %s1445, 256, %s18, [#allocation19], 128, 128, 8
    $region113: #{_gimvi_step_impl.1} parent=1 // pred_fallthru
      _
    // Predicated region
    $region114: #{_gimvi_step_impl.1} parent=1 // pred_check
      _
    $region115: #{_gimvi_step_impl.1} parent=1 // pred_check_branch
      %1452 = sbr.rel (0) target = $region117
    $region116: #{_gimvi_step_impl.1} parent=1 // pred_region
      %s1454 = ssub.s32 256, 256
      %1455 = vsyncadd [#allocation22], %s1454
      %s1456 = sshll.u32 [#allocation21], 4
      %s1457 = int_to_ptr.vmem [resolvable:$true] %s1456
      %1462 = dma.vmem_to_hbm [thread:$0]  %s1457, 256, %s19, [#allocation22], 128, 128, 8
    $region117: #{_gimvi_step_impl.1} parent=1 // pred_fallthru
      _
    // Predicated region
    $region118: #{_gimvi_step_impl.1} parent=1 // pred_check
      _
    $region119: #{_gimvi_step_impl.1} parent=1 // pred_check_branch
      %1464 = sbr.rel (0) target = $region121
    $region120: #{_gimvi_step_impl.1} parent=1 // pred_region
      %s1466 = ssub.s32 256, 256
      %1467 = vsyncadd [#allocation22], %s1466
      %s1468 = sshll.u32 [#allocation23], 4
      %s1469 = int_to_ptr.vmem [resolvable:$true] %s1468
      %1474 = dma.vmem_to_hbm [thread:$0]  %s1469, 256, %s20, [#allocation22], 128, 128, 8
    $region121: #{_gimvi_step_impl.1} parent=1 // pred_fallthru
      _
    // Predicated region
    $region122: #{_gimvi_step_impl.1} parent=1 // pred_check
      _
    $region123: #{_gimvi_step_impl.1} parent=1 // pred_check_branch
      %1476 = sbr.rel (0) target = $region125
    $region124: #{_gimvi_step_impl.1} parent=1 // pred_region
      %s1478 = ssub.s32 256, 256
      %1479 = vsyncadd [#allocation25], %s1478
      %s1480 = sshll.u32 [#allocation24], 4
      %s1481 = int_to_ptr.vmem [resolvable:$true] %s1480
      %1486 = dma.vmem_to_hbm [thread:$0]  %s1481, 256, %s21, [#allocation25], 128, 128, 8
    $region125: #{_gimvi_step_impl.1} parent=1 // pred_fallthru
      _
    // Predicated region
    $region126: #{_gimvi_step_impl.1} parent=1 // pred_check
      _
    $region127: #{_gimvi_step_impl.1} parent=1 // pred_check_branch
      %1488 = sbr.rel (0) target = $region129
    $region128: #{_gimvi_step_impl.1} parent=1 // pred_region
      %s1490 = ssub.s32 256, 256
      %1491 = vsyncadd [#allocation25], %s1490
      %s1492 = sshll.u32 [#allocation26], 4
      %s1493 = int_to_ptr.vmem [resolvable:$true] %s1492
      %1498 = dma.vmem_to_hbm [thread:$0]  %s1493, 256, %s22, [#allocation25], 128, 128, 8
    $region129: #{_gimvi_step_impl.1} parent=1 // pred_fallthru
      _
    // Predicated region
    $region130: #{_gimvi_step_impl.1} parent=1 // pred_check
      _
    $region131: #{_gimvi_step_impl.1} parent=1 // pred_check_branch
      %1500 = sbr.rel (0) target = $region133
    $region132: #{_gimvi_step_impl.1} parent=1 // pred_region
      %s1502 = ssub.s32 256, 256
      %1503 = vsyncadd [#allocation28], %s1502
      %s1504 = sshll.u32 [#allocation27], 4
      %s1505 = int_to_ptr.vmem [resolvable:$true] %s1504
      %1510 = dma.vmem_to_hbm [thread:$0]  %s1505, 256, %s23, [#allocation28], 128, 128, 8
    $region133: #{_gimvi_step_impl.1} parent=1 // pred_fallthru
      _
    // Predicated region
    $region134: #{_gimvi_step_impl.1} parent=1 // pred_check
      _
    $region135: #{_gimvi_step_impl.1} parent=1 // pred_check_branch
      %1512 = sbr.rel (0) target = $region137
    $region136: #{_gimvi_step_impl.1} parent=1 // pred_region
      %s1514 = ssub.s32 256, 256
      %1515 = vsyncadd [#allocation28], %s1514
      %s1516 = sshll.u32 [#allocation29], 4
      %s1517 = int_to_ptr.vmem [resolvable:$true] %s1516
      %1522 = dma.vmem_to_hbm [thread:$0]  %s1517, 256, %s24, [#allocation28], 128, 128, 8
    $region137: #{_gimvi_step_impl.1} parent=1 // pred_fallthru
      _
    // Predicated region
    $region138: #{_gimvi_step_impl.1} parent=1 // pred_check
      _
    $region139: #{_gimvi_step_impl.1} parent=1 // pred_check_branch
      %1524 = sbr.rel (0) target = $region141
    $region140: #{_gimvi_step_impl.1} parent=1 // pred_region
      %s1526 = ssub.s32 256, 256
      %1527 = vsyncadd [#allocation31], %s1526
      %s1528 = sshll.u32 [#allocation30], 4
      %s1529 = int_to_ptr.vmem [resolvable:$true] %s1528
      %1534 = dma.vmem_to_hbm [thread:$0]  %s1529, 256, %s25, [#allocation31], 128, 128, 8
    $region141: #{_gimvi_step_impl.1} parent=1 // pred_fallthru
      _
    // Predicated region
    $region142: #{_gimvi_step_impl.1} parent=1 // pred_check
      _
    $region143: #{_gimvi_step_impl.1} parent=1 // pred_check_branch
      %1536 = sbr.rel (0) target = $region145
    $region144: #{_gimvi_step_impl.1} parent=1 // pred_region
      _
    $region145: #{_gimvi_step_impl.1} parent=1 // pred_fallthru
      _
    // Predicated region
    $region146: #{_gimvi_step_impl.1} parent=1 // pred_check
      _
    $region147: #{_gimvi_step_impl.1} parent=1 // pred_check_branch
      %1538 = sbr.rel (0) target = $region149
    $region148: #{_gimvi_step_impl.1} parent=1 // pred_region
      %1539 = dma.done [#allocation4], 256
    $region149: #{_gimvi_step_impl.1} parent=1 // pred_fallthru
      _
    // Predicated region
    $region150: #{_gimvi_step_impl.1} parent=1 // pred_check
      _
    $region151: #{_gimvi_step_impl.1} parent=1 // pred_check_branch
      %1541 = sbr.rel (0) target = $region153
    $region152: #{_gimvi_step_impl.1} parent=1 // pred_region
      %1542 = dma.done [#allocation19], 256
    $region153: #{_gimvi_step_impl.1} parent=1 // pred_fallthru
      _
    // Predicated region
    $region154: #{_gimvi_step_impl.1} parent=1 // pred_check
      _
    $region155: #{_gimvi_step_impl.1} parent=1 // pred_check_branch
      %1544 = sbr.rel (0) target = $region157
    $region156: #{_gimvi_step_impl.1} parent=1 // pred_region
      %1545 = dma.done [#allocation19], 256
    $region157: #{_gimvi_step_impl.1} parent=1 // pred_fallthru
      _
    // Predicated region
    $region158: #{_gimvi_step_impl.1} parent=1 // pred_check
      _
    $region159: #{_gimvi_step_impl.1} parent=1 // pred_check_branch
      %1547 = sbr.rel (0) target = $region161
    $region160: #{_gimvi_step_impl.1} parent=1 // pred_region
      %1548 = dma.done [#allocation22], 256
    $region161: #{_gimvi_step_impl.1} parent=1 // pred_fallthru
      _
    // Predicated region
    $region162: #{_gimvi_step_impl.1} parent=1 // pred_check
      _
    $region163: #{_gimvi_step_impl.1} parent=1 // pred_check_branch
      %1550 = sbr.rel (0) target = $region165
    $region164: #{_gimvi_step_impl.1} parent=1 // pred_region
      %1551 = dma.done [#allocation22], 256
    $region165: #{_gimvi_step_impl.1} parent=1 // pred_fallthru
      _
    // Predicated region
    $region166: #{_gimvi_step_impl.1} parent=1 // pred_check
      _
    $region167: #{_gimvi_step_impl.1} parent=1 // pred_check_branch
      %1553 = sbr.rel (0) target = $region169
    $region168: #{_gimvi_step_impl.1} parent=1 // pred_region
      %1554 = dma.done [#allocation25], 256
    $region169: #{_gimvi_step_impl.1} parent=1 // pred_fallthru
      _
    // Predicated region
    $region170: #{_gimvi_step_impl.1} parent=1 // pred_check
      _
    $region171: #{_gimvi_step_impl.1} parent=1 // pred_check_branch
      %1556 = sbr.rel (0) target = $region173
    $region172: #{_gimvi_step_impl.1} parent=1 // pred_region
      %1557 = dma.done [#allocation25], 256
    $region173: #{_gimvi_step_impl.1} parent=1 // pred_fallthru
      _
    // Predicated region
    $region174: #{_gimvi_step_impl.1} parent=1 // pred_check
      _
    $region175: #{_gimvi_step_impl.1} parent=1 // pred_check_branch
      %1559 = sbr.rel (0) target = $region177
    $region176: #{_gimvi_step_impl.1} parent=1 // pred_region
      %1560 = dma.done [#allocation28], 256
    $region177: #{_gimvi_step_impl.1} parent=1 // pred_fallthru
      _
    // Predicated region
    $region178: #{_gimvi_step_impl.1} parent=1 // pred_check
      _
    $region179: #{_gimvi_step_impl.1} parent=1 // pred_check_branch
      %1562 = sbr.rel (0) target = $region181
    $region180: #{_gimvi_step_impl.1} parent=1 // pred_region
      %1563 = dma.done [#allocation28], 256
    $region181: #{_gimvi_step_impl.1} parent=1 // pred_fallthru
      _
    // Predicated region
    $region182: #{_gimvi_step_impl.1} parent=1 // pred_check
      _
    $region183: #{_gimvi_step_impl.1} parent=1 // pred_check_branch
      %1565 = sbr.rel (0) target = $region185
    $region184: #{_gimvi_step_impl.1} parent=1 // pred_region
      %1566 = dma.done [#allocation31], 256
    $region185: #{_gimvi_step_impl.1} parent=1 // pred_fallthru
      _
    // Predicated region
    $region186: #{_gimvi_step_impl.1} parent=1 // pred_check
      _
    $region187: #{_gimvi_step_impl.1} parent=1 // pred_check_branch
      %1568 = sbr.rel (0) target = $region189
    $region188: #{_gimvi_step_impl.1} parent=1 // pred_region
      _
    $region189: #{_gimvi_step_impl.1} parent=1 // pred_fallthru
      _
    %1569 = vsyncpa [#allocation3], 1
    %1570 = vsyncpa [#allocation6], 1
    %1571 = vsyncpa [#allocation9], 1
    %1572 = vsyncpa [#allocation12], 1
    %1573 = vsyncpa [#allocation15], 1
    %1574 = vsyncpa [#allocation4], 1
    %1575 = vsyncpa [#allocation19], 1
    %1576 = vsyncpa [#allocation22], 1
    %1577 = vsyncpa [#allocation25], 1
    %1578 = vsyncpa [#allocation28], 1
    %1579 = vsyncpa [#allocation31], 1

</llo_original>
